<compile_context>
chip_gen: v5e
topology: v5e:2x2
jax: 0.10.0
libtpu: 0.0.40
codegen_flags: <defaults>
</compile_context>

<pallas_src>
import functools
import math

import jax
import jax.numpy as jnp
from jax.experimental import pallas as pl
from jax.experimental.pallas import tpu as pltpu


def _pmodule_kernel(x_ref, w1_ref, b1_ref, wdw_ref, bdw_ref, w2_ref, b2_ref,
                    o_ref, pad_ref, *, H, W, C, K):
    """One batch element per grid step.

    x_ref  : (1, L, dim)        tokens, L = H*W
    w1_ref : (dim, C)           linear1 weight (transposed)
    b1_ref : (1, C)             linear1 bias
    wdw_ref: (K*K, C)           depthwise taps, channels on lanes
    bdw_ref: (1, C)             depthwise bias
    w2_ref : (C//2, OUTP)       linear2 weight (transposed, zero-padded to OUTP)
    b2_ref : (1, OUTP)          linear2 bias (zero-padded)
    o_ref  : (1, L, OUTP)       output (lane-dense; wrapper slices to dim)
    pad_ref: (H+K-1, W+K-1, C)  VMEM scratch for the zero-padded activation
    """
    L = H * W
    pad = (K - 1) // 2
    half = C // 2

    # ---- linear1 on the MXU: (L, dim) @ (dim, C) ----
    h = jnp.dot(x_ref[0], w1_ref[...], preferred_element_type=jnp.float32)
    h = h + b1_ref[0, :]                                   # (L, C)

    # ---- place into zero-padded scratch (channels stay on the lane axis) ----
    pad_ref[...] = jnp.zeros_like(pad_ref)
    pad_ref[pl.ds(pad, H), pl.ds(pad, W), :] = h.reshape(H, W, C)

    # ---- depthwise KxK conv: lane-dense VPU MACs, taps hoisted out of loop ----
    taps = wdw_ref[...]                                    # (K*K, C), loaded once
    acc = jnp.zeros((H, W, C), jnp.float32)
    for kh in range(K):
        for kw in range(K):
            patch = pad_ref[pl.ds(kh, H), pl.ds(kw, W), :]  # (H, W, C)
            acc = acc + patch * taps[kh * K + kw, :]
    acc = acc + bdw_ref[0, :]                              # bias added once

    # ---- gate: chunk(2, channel) then elementwise product ----
    x3 = acc[:, :, :half] * acc[:, :, half:]               # (H, W, C//2)

    # ---- linear2 on the MXU: (L, C//2) @ (C//2, OUTP); lane-dense store ----
    y = jnp.dot(x3.reshape(L, half), w2_ref[...],
                preferred_element_type=jnp.float32)
    y = y + b2_ref[0, :]
    o_ref[0] = y.astype(o_ref.dtype)


def pmodule_pallas(x, w1, b1, w_dw, b_dw, w2, b2, *, img_size):
    """x: (B, L, dim) with L == img_size[0] * img_size[1]. Returns (B, L, dim)."""
    B, L, dim = x.shape
    hh, ww = img_size
    assert hh * ww == L, "img_size must match the sequence length"
    hidden = w1.shape[0]
    half = hidden // 2
    K = w_dw.shape[-1]
    out_pad = ((dim + 127) // 128) * 128   # lane-dense output channel count

    # Parameter repacks (done once, outside the kernel).
    w1_t = jnp.transpose(w1)                               # (dim, hidden)
    b1_r = b1.reshape(1, hidden)
    wdw = jnp.transpose(w_dw.reshape(hidden, K * K))       # (K*K, hidden)
    bdw = b_dw.reshape(1, hidden)
    w2_t = jnp.transpose(w2)                               # (half, dim)
    w2_p = jnp.pad(w2_t, ((0, 0), (0, out_pad - dim)))     # (half, out_pad)
    b2_p = jnp.pad(b2, (0, out_pad - dim)).reshape(1, out_pad)

    kernel = functools.partial(_pmodule_kernel, H=hh, W=ww, C=hidden, K=K)

    out = pl.pallas_call(
        kernel,
        out_shape=jax.ShapeDtypeStruct((B, L, out_pad), x.dtype),
        grid_spec=pltpu.PrefetchScalarGridSpec(
            num_scalar_prefetch=0,
            grid=(B,),
            in_specs=[
                pl.BlockSpec((1, L, dim), lambda n: (n, 0, 0)),        # x
                pl.BlockSpec((dim, hidden), lambda n: (0, 0)),         # w1
                pl.BlockSpec((1, hidden), lambda n: (0, 0)),           # b1
                pl.BlockSpec((K * K, hidden), lambda n: (0, 0)),       # dw taps
                pl.BlockSpec((1, hidden), lambda n: (0, 0)),           # dw bias
                pl.BlockSpec((half, out_pad), lambda n: (0, 0)),       # w2 (padded)
                pl.BlockSpec((1, out_pad), lambda n: (0, 0)),          # b2 (padded)
            ],
            out_specs=pl.BlockSpec((1, L, out_pad), lambda n: (n, 0, 0)),
            scratch_shapes=[
                pltpu.VMEM((hh + K - 1, ww + K - 1, hidden), jnp.float32),
            ],
        ),
        compiler_params=pltpu.CompilerParams(
            dimension_semantics=("parallel",)),
    )(x, w1_t, b1_r, wdw, bdw, w2_p, b2_p)

    return out[:, :, :dim]   # drop the lane padding


def _reference(x, w1, b1, w_dw, b_dw, w2, b2, hh, ww):
    """Pure-JAX reference matching the PyTorch forward (for correctness check)."""
    B, L, dim = x.shape
    hidden = w1.shape[0]
    half = hidden // 2
    h = jnp.dot(x, w1.T, precision=jax.lax.Precision.HIGHEST) + b1   # (B, L, hidden)
    h_nchw = jnp.transpose(h.reshape(B, hh, ww, hidden), (0, 3, 1, 2))
    conv = jax.lax.conv_general_dilated(
        h_nchw, w_dw, window_strides=(1, 1), padding=((1, 1), (1, 1)),
        dimension_numbers=("NCHW", "OIHW", "NCHW"),
        feature_group_count=hidden,
        precision=jax.lax.Precision.HIGHEST)
    conv = conv + b_dw.reshape(1, -1, 1, 1)
    x3 = conv[:, :half] * conv[:, half:]                              # (B, half, hh, ww)
    x3 = jnp.transpose(x3, (0, 2, 3, 1)).reshape(B, L, half)
    y = jnp.dot(x3, w2.T, precision=jax.lax.Precision.HIGHEST) + b2
    return y


if __name__ == "__main__":
    # Module defaults: dim=32, hidden_dim=128, dwconv 3x3 / stride 1 / pad 1.
    # Small test shapes: batch=2, img_size=(16, 16) -> seq len L=256.
    dim, hidden_dim = 32, 128
    B, hh, ww = 2, 16, 16
    L = hh * ww
    K = 3

    key = jax.random.PRNGKey(0)
    k_x, k_w1, k_b1, k_wd, k_bd, k_w2, k_b2 = jax.random.split(key, 7)

    x = jax.random.normal(k_x, (B, L, dim), jnp.float32)

    # PyTorch-like shapes and uniform init scales.
    bound1 = 1.0 / math.sqrt(dim)
    w1 = jax.random.uniform(k_w1, (hidden_dim, dim), jnp.float32, -bound1, bound1)
    b1 = jax.random.uniform(k_b1, (hidden_dim,), jnp.float32, -bound1, bound1)

    bound_dw = 1.0 / math.sqrt(1 * K * K)   # per-group fan-in
    w_dw = jax.random.uniform(k_wd, (hidden_dim, 1, K, K), jnp.float32,
                              -bound_dw, bound_dw)
    b_dw = jax.random.uniform(k_bd, (hidden_dim,), jnp.float32, -bound_dw, bound_dw)

    bound2 = 1.0 / math.sqrt(hidden_dim // 2)
    w2 = jax.random.uniform(k_w2, (dim, hidden_dim // 2), jnp.float32,
                            -bound2, bound2)
    b2 = jax.random.uniform(k_b2, (dim,), jnp.float32, -bound2, bound2)

    out = pmodule_pallas(x, w1, b1, w_dw, b_dw, w2, b2, img_size=(hh, ww))
    out = jax.block_until_ready(out)

    ref = _reference(x, w1, b1, w_dw, b_dw, w2, b2, hh, ww)
    assert out.shape == (B, L, dim), out.shape
    assert jnp.allclose(out, ref, atol=1e-4, rtol=1e-4), "mismatch vs reference"

    print("KERNEL_OK")
</pallas_src>

<mosaic_0001>
module attributes {stable_mosaic.version = 11 : i64} {
  func.func @_pmodule_kernel(%arg0: i32, %arg1: memref<1x256x32xf32, #tpu.memory_space<vmem>>, %arg2: memref<32x128xf32, #tpu.memory_space<vmem>>, %arg3: memref<1x128xf32, #tpu.memory_space<vmem>>, %arg4: memref<9x128xf32, #tpu.memory_space<vmem>>, %arg5: memref<1x128xf32, #tpu.memory_space<vmem>>, %arg6: memref<64x128xf32, #tpu.memory_space<vmem>>, %arg7: memref<1x128xf32, #tpu.memory_space<vmem>>, %arg8: memref<1x256x128xf32, #tpu.memory_space<vmem>>, %arg9: memref<18x18x128xf32, #tpu.memory_space<vmem>>) attributes {dimension_semantics = [#tpu.dimension_semantics<parallel>], iteration_bounds = array<i64: 2>, scalar_prefetch = 0 : i64, scratch_operands = 1 : i64, tpu.core_type = #tpu.core_type<tc>, window_params = [{transform_indices = @transform_0, window_bounds = array<i64: 1, 256, 32>}, {pipeline_mode = #tpu.pipeline_mode<synchronous>, transform_indices = @transform_1, window_bounds = array<i64: 32, 128>}, {pipeline_mode = #tpu.pipeline_mode<synchronous>, transform_indices = @transform_2, window_bounds = array<i64: 1, 128>}, {pipeline_mode = #tpu.pipeline_mode<synchronous>, transform_indices = @transform_3, window_bounds = array<i64: 9, 128>}, {pipeline_mode = #tpu.pipeline_mode<synchronous>, transform_indices = @transform_4, window_bounds = array<i64: 1, 128>}, {pipeline_mode = #tpu.pipeline_mode<synchronous>, transform_indices = @transform_5, window_bounds = array<i64: 64, 128>}, {pipeline_mode = #tpu.pipeline_mode<synchronous>, transform_indices = @transform_6, window_bounds = array<i64: 1, 128>}, {transform_indices = @transform_7, window_bounds = array<i64: 1, 256, 128>}]} {
    %c0 = arith.constant 0 : index
    %c0_0 = arith.constant 0 : index
    %c0_1 = arith.constant 0 : index
    %0 = vector.load %arg1[%c0, %c0_0, %c0_1] : memref<1x256x32xf32, #tpu.memory_space<vmem>>, vector<1x256x32xf32>
    %1 = vector.shape_cast %0 : vector<1x256x32xf32> to vector<256x32xf32>
    %c0_2 = arith.constant 0 : index
    %c0_3 = arith.constant 0 : index
    %2 = vector.load %arg2[%c0_2, %c0_3] : memref<32x128xf32, #tpu.memory_space<vmem>>, vector<32x128xf32>
    %cst = arith.constant dense<0.000000e+00> : vector<256x128xf32>
    %3 = tpu.matmul %1, %2, %cst {dimension_numbers = #tpu.dot_dimension_numbers<[1], [0], [0], [1], [0, 0, 1, 1], [], []>} : vector<256x32xf32>, vector<32x128xf32>, vector<256x128xf32> -> vector<256x128xf32>
    %c0_4 = arith.constant 0 : index
    %c0_5 = arith.constant 0 : index
    %4 = vector.load %arg3[%c0_4, %c0_5] : memref<1x128xf32, #tpu.memory_space<vmem>>, vector<1x128xf32>
    %5 = vector.shape_cast %4 : vector<1x128xf32> to vector<128xf32>
    %6 = vector.shape_cast %5 : vector<128xf32> to vector<1x128xf32>
    %7 = vector.broadcast %6 : vector<1x128xf32> to vector<256x128xf32>
    %8 = arith.addf %3, %7 : vector<256x128xf32>
    %cst_6 = arith.constant 0.000000e+00 : f32
    %9 = vector.broadcast %cst_6 : f32 to vector<18x18x128xf32>
    %c0_7 = arith.constant 0 : index
    %c0_8 = arith.constant 0 : index
    %c0_9 = arith.constant 0 : index
    %10 = vector.load %arg9[%c0_7, %c0_8, %c0_9] : memref<18x18x128xf32, #tpu.memory_space<vmem>>, vector<18x18x128xf32>
    tpu.vector_store %arg9[%c0_7, %c0_8, %c0_9], %9 {strides = array<i32>} : memref<18x18x128xf32, #tpu.memory_space<vmem>>, vector<18x18x128xf32>,
    %11 = vector.shape_cast %8 : vector<256x128xf32> to vector<16x16x128xf32>
    %c1 = arith.constant 1 : index
    %c1_10 = arith.constant 1 : index
    %c0_11 = arith.constant 0 : index
    %12 = vector.load %arg9[%c1, %c1_10, %c0_11] : memref<18x18x128xf32, #tpu.memory_space<vmem>>, vector<16x16x128xf32>
    tpu.vector_store %arg9[%c1, %c1_10, %c0_11], %11 {strides = array<i32>} : memref<18x18x128xf32, #tpu.memory_space<vmem>>, vector<16x16x128xf32>,
    %c0_12 = arith.constant 0 : index
    %c0_13 = arith.constant 0 : index
    %13 = vector.load %arg4[%c0_12, %c0_13] : memref<9x128xf32, #tpu.memory_space<vmem>>, vector<9x128xf32>
    %cst_14 = arith.constant 0.000000e+00 : f32
    %14 = vector.broadcast %cst_14 : f32 to vector<16x16x128xf32>
    %c0_15 = arith.constant 0 : index
    %c0_16 = arith.constant 0 : index
    %c0_17 = arith.constant 0 : index
    %15 = vector.load %arg9[%c0_15, %c0_16, %c0_17] : memref<18x18x128xf32, #tpu.memory_space<vmem>>, vector<16x16x128xf32>
    %16 = vector.extract_strided_slice %13 {offsets = [0, 0], sizes = [1, 128], strides = [1, 1]} : vector<9x128xf32> to vector<1x128xf32>
    %17 = vector.shape_cast %16 : vector<1x128xf32> to vector<128xf32>
    %18 = vector.shape_cast %17 : vector<128xf32> to vector<1x1x128xf32>
    %19 = vector.broadcast %18 : vector<1x1x128xf32> to vector<16x16x128xf32>
    %20 = arith.mulf %15, %19 : vector<16x16x128xf32>
    %21 = arith.addf %14, %20 : vector<16x16x128xf32>
    %c0_18 = arith.constant 0 : index
    %c1_19 = arith.constant 1 : index
    %c0_20 = arith.constant 0 : index
    %22 = vector.load %arg9[%c0_18, %c1_19, %c0_20] : memref<18x18x128xf32, #tpu.memory_space<vmem>>, vector<16x16x128xf32>
    %23 = vector.extract_strided_slice %13 {offsets = [1, 0], sizes = [1, 128], strides = [1, 1]} : vector<9x128xf32> to vector<1x128xf32>
    %24 = vector.shape_cast %23 : vector<1x128xf32> to vector<128xf32>
    %25 = vector.shape_cast %24 : vector<128xf32> to vector<1x1x128xf32>
    %26 = vector.broadcast %25 : vector<1x1x128xf32> to vector<16x16x128xf32>
    %27 = arith.mulf %22, %26 : vector<16x16x128xf32>
    %28 = arith.addf %21, %27 : vector<16x16x128xf32>
    %c0_21 = arith.constant 0 : index
    %c2 = arith.constant 2 : index
    %c0_22 = arith.constant 0 : index
    %29 = vector.load %arg9[%c0_21, %c2, %c0_22] : memref<18x18x128xf32, #tpu.memory_space<vmem>>, vector<16x16x128xf32>
    %30 = vector.extract_strided_slice %13 {offsets = [2, 0], sizes = [1, 128], strides = [1, 1]} : vector<9x128xf32> to vector<1x128xf32>
    %31 = vector.shape_cast %30 : vector<1x128xf32> to vector<128xf32>
    %32 = vector.shape_cast %31 : vector<128xf32> to vector<1x1x128xf32>
    %33 = vector.broadcast %32 : vector<1x1x128xf32> to vector<16x16x128xf32>
    %34 = arith.mulf %29, %33 : vector<16x16x128xf32>
    %35 = arith.addf %28, %34 : vector<16x16x128xf32>
    %c1_23 = arith.constant 1 : index
    %c0_24 = arith.constant 0 : index
    %c0_25 = arith.constant 0 : index
    %36 = vector.load %arg9[%c1_23, %c0_24, %c0_25] : memref<18x18x128xf32, #tpu.memory_space<vmem>>, vector<16x16x128xf32>
    %37 = vector.extract_strided_slice %13 {offsets = [3, 0], sizes = [1, 128], strides = [1, 1]} : vector<9x128xf32> to vector<1x128xf32>
    %38 = vector.shape_cast %37 : vector<1x128xf32> to vector<128xf32>
    %39 = vector.shape_cast %38 : vector<128xf32> to vector<1x1x128xf32>
    %40 = vector.broadcast %39 : vector<1x1x128xf32> to vector<16x16x128xf32>
    %41 = arith.mulf %36, %40 : vector<16x16x128xf32>
    %42 = arith.addf %35, %41 : vector<16x16x128xf32>
    %c1_26 = arith.constant 1 : index
    %c1_27 = arith.constant 1 : index
    %c0_28 = arith.constant 0 : index
    %43 = vector.load %arg9[%c1_26, %c1_27, %c0_28] : memref<18x18x128xf32, #tpu.memory_space<vmem>>, vector<16x16x128xf32>
    %44 = vector.extract_strided_slice %13 {offsets = [4, 0], sizes = [1, 128], strides = [1, 1]} : vector<9x128xf32> to vector<1x128xf32>
    %45 = vector.shape_cast %44 : vector<1x128xf32> to vector<128xf32>
    %46 = vector.shape_cast %45 : vector<128xf32> to vector<1x1x128xf32>
    %47 = vector.broadcast %46 : vector<1x1x128xf32> to vector<16x16x128xf32>
    %48 = arith.mulf %43, %47 : vector<16x16x128xf32>
    %49 = arith.addf %42, %48 : vector<16x16x128xf32>
    %c1_29 = arith.constant 1 : index
    %c2_30 = arith.constant 2 : index
    %c0_31 = arith.constant 0 : index
    %50 = vector.load %arg9[%c1_29, %c2_30, %c0_31] : memref<18x18x128xf32, #tpu.memory_space<vmem>>, vector<16x16x128xf32>
    %51 = vector.extract_strided_slice %13 {offsets = [5, 0], sizes = [1, 128], strides = [1, 1]} : vector<9x128xf32> to vector<1x128xf32>
    %52 = vector.shape_cast %51 : vector<1x128xf32> to vector<128xf32>
    %53 = vector.shape_cast %52 : vector<128xf32> to vector<1x1x128xf32>
    %54 = vector.broadcast %53 : vector<1x1x128xf32> to vector<16x16x128xf32>
    %55 = arith.mulf %50, %54 : vector<16x16x128xf32>
    %56 = arith.addf %49, %55 : vector<16x16x128xf32>
    %c2_32 = arith.constant 2 : index
    %c0_33 = arith.constant 0 : index
    %c0_34 = arith.constant 0 : index
    %57 = vector.load %arg9[%c2_32, %c0_33, %c0_34] : memref<18x18x128xf32, #tpu.memory_space<vmem>>, vector<16x16x128xf32>
    %58 = vector.extract_strided_slice %13 {offsets = [6, 0], sizes = [1, 128], strides = [1, 1]} : vector<9x128xf32> to vector<1x128xf32>
    %59 = vector.shape_cast %58 : vector<1x128xf32> to vector<128xf32>
    %60 = vector.shape_cast %59 : vector<128xf32> to vector<1x1x128xf32>
    %61 = vector.broadcast %60 : vector<1x1x128xf32> to vector<16x16x128xf32>
    %62 = arith.mulf %57, %61 : vector<16x16x128xf32>
    %63 = arith.addf %56, %62 : vector<16x16x128xf32>
    %c2_35 = arith.constant 2 : index
    %c1_36 = arith.constant 1 : index
    %c0_37 = arith.constant 0 : index
    %64 = vector.load %arg9[%c2_35, %c1_36, %c0_37] : memref<18x18x128xf32, #tpu.memory_space<vmem>>, vector<16x16x128xf32>
    %65 = vector.extract_strided_slice %13 {offsets = [7, 0], sizes = [1, 128], strides = [1, 1]} : vector<9x128xf32> to vector<1x128xf32>
    %66 = vector.shape_cast %65 : vector<1x128xf32> to vector<128xf32>
    %67 = vector.shape_cast %66 : vector<128xf32> to vector<1x1x128xf32>
    %68 = vector.broadcast %67 : vector<1x1x128xf32> to vector<16x16x128xf32>
    %69 = arith.mulf %64, %68 : vector<16x16x128xf32>
    %70 = arith.addf %63, %69 : vector<16x16x128xf32>
    %c2_38 = arith.constant 2 : index
    %c2_39 = arith.constant 2 : index
    %c0_40 = arith.constant 0 : index
    %71 = vector.load %arg9[%c2_38, %c2_39, %c0_40] : memref<18x18x128xf32, #tpu.memory_space<vmem>>, vector<16x16x128xf32>
    %72 = vector.extract_strided_slice %13 {offsets = [8, 0], sizes = [1, 128], strides = [1, 1]} : vector<9x128xf32> to vector<1x128xf32>
    %73 = vector.shape_cast %72 : vector<1x128xf32> to vector<128xf32>
    %74 = vector.shape_cast %73 : vector<128xf32> to vector<1x1x128xf32>
    %75 = vector.broadcast %74 : vector<1x1x128xf32> to vector<16x16x128xf32>
    %76 = arith.mulf %71, %75 : vector<16x16x128xf32>
    %77 = arith.addf %70, %76 : vector<16x16x128xf32>
    %c0_41 = arith.constant 0 : index
    %c0_42 = arith.constant 0 : index
    %78 = vector.load %arg5[%c0_41, %c0_42] : memref<1x128xf32, #tpu.memory_space<vmem>>, vector<1x128xf32>
    %79 = vector.shape_cast %78 : vector<1x128xf32> to vector<128xf32>
    %80 = vector.shape_cast %79 : vector<128xf32> to vector<1x1x128xf32>
    %81 = vector.broadcast %80 : vector<1x1x128xf32> to vector<16x16x128xf32>
    %82 = arith.addf %77, %81 : vector<16x16x128xf32>
    %83 = vector.extract_strided_slice %82 {offsets = [0, 0, 0], sizes = [16, 16, 64], strides = [1, 1, 1]} : vector<16x16x128xf32> to vector<16x16x64xf32>
    %84 = vector.extract_strided_slice %82 {offsets = [0, 0, 64], sizes = [16, 16, 64], strides = [1, 1, 1]} : vector<16x16x128xf32> to vector<16x16x64xf32>
    %85 = arith.mulf %83, %84 : vector<16x16x64xf32>
    %86 = vector.shape_cast %85 : vector<16x16x64xf32> to vector<256x64xf32>
    %c0_43 = arith.constant 0 : index
    %c0_44 = arith.constant 0 : index
    %87 = vector.load %arg6[%c0_43, %c0_44] : memref<64x128xf32, #tpu.memory_space<vmem>>, vector<64x128xf32>
    %cst_45 = arith.constant dense<0.000000e+00> : vector<256x128xf32>
    %88 = tpu.matmul %86, %87, %cst_45 {dimension_numbers = #tpu.dot_dimension_numbers<[1], [0], [0], [1], [0, 0, 1, 1], [], []>} : vector<256x64xf32>, vector<64x128xf32>, vector<256x128xf32> -> vector<256x128xf32>
    %c0_46 = arith.constant 0 : index
    %c0_47 = arith.constant 0 : index
    %89 = vector.load %arg7[%c0_46, %c0_47] : memref<1x128xf32, #tpu.memory_space<vmem>>, vector<1x128xf32>
    %90 = vector.shape_cast %89 : vector<1x128xf32> to vector<128xf32>
    %91 = vector.shape_cast %90 : vector<128xf32> to vector<1x128xf32>
    %92 = vector.broadcast %91 : vector<1x128xf32> to vector<256x128xf32>
    %93 = arith.addf %88, %92 : vector<256x128xf32>
    %c0_48 = arith.constant 0 : index
    %c0_49 = arith.constant 0 : index
    %c0_50 = arith.constant 0 : index
    %94 = vector.load %arg8[%c0_48, %c0_49, %c0_50] : memref<1x256x128xf32, #tpu.memory_space<vmem>>, vector<1x256x128xf32>
    %95 = vector.shape_cast %94 : vector<1x256x128xf32> to vector<256x128xf32>
    %96 = vector.shape_cast %93 : vector<256x128xf32> to vector<1x256x128xf32>
    tpu.vector_store %arg8[%c0_48, %c0_49, %c0_50], %96 {strides = array<i32>} : memref<1x256x128xf32, #tpu.memory_space<vmem>>, vector<1x256x128xf32>,
    return
  }
  func.func @transform_0(%arg0: i32) -> (i32, i32, i32) {
    %c0_i32 = arith.constant 0 : i32
    %c0_i32_0 = arith.constant 0 : i32
    %c0_i32_1 = arith.constant 0 : i32
    return %arg0, %c0_i32, %c0_i32_0 : i32, i32, i32
  }
  func.func @transform_1(%arg0: i32) -> (i32, i32) {
    %c0_i32 = arith.constant 0 : i32
    %c0_i32_0 = arith.constant 0 : i32
    %c0_i32_1 = arith.constant 0 : i32
    return %c0_i32, %c0_i32_0 : i32, i32
  }
  func.func @transform_2(%arg0: i32) -> (i32, i32) {
    %c0_i32 = arith.constant 0 : i32
    %c0_i32_0 = arith.constant 0 : i32
    %c0_i32_1 = arith.constant 0 : i32
    return %c0_i32, %c0_i32_0 : i32, i32
  }
  func.func @transform_3(%arg0: i32) -> (i32, i32) {
    %c0_i32 = arith.constant 0 : i32
    %c0_i32_0 = arith.constant 0 : i32
    %c0_i32_1 = arith.constant 0 : i32
    return %c0_i32, %c0_i32_0 : i32, i32
  }
  func.func @transform_4(%arg0: i32) -> (i32, i32) {
    %c0_i32 = arith.constant 0 : i32
    %c0_i32_0 = arith.constant 0 : i32
    %c0_i32_1 = arith.constant 0 : i32
    return %c0_i32, %c0_i32_0 : i32, i32
  }
  func.func @transform_5(%arg0: i32) -> (i32, i32) {
    %c0_i32 = arith.constant 0 : i32
    %c0_i32_0 = arith.constant 0 : i32
    %c0_i32_1 = arith.constant 0 : i32
    return %c0_i32, %c0_i32_0 : i32, i32
  }
  func.func @transform_6(%arg0: i32) -> (i32, i32) {
    %c0_i32 = arith.constant 0 : i32
    %c0_i32_0 = arith.constant 0 : i32
    %c0_i32_1 = arith.constant 0 : i32
    return %c0_i32, %c0_i32_0 : i32, i32
  }
  func.func @transform_7(%arg0: i32) -> (i32, i32, i32) {
    %c0_i32 = arith.constant 0 : i32
    %c0_i32_0 = arith.constant 0 : i32
    %c0_i32_1 = arith.constant 0 : i32
    return %arg0, %c0_i32, %c0_i32_0 : i32, i32, i32
  }
}

</mosaic_0001>

<llo_original>
// kernel: tpu_custom_call.1
$region0: #{tpu_custom_call.1}
  #allocation0 [shape = 'u32[]', space=smem, size = 0x4, offset = 0x4, fixed_abs, tag = 'smem constant byte address 0x4 - core index']
  #allocation1 [shape = 'u32[72,128]{1,0:T(1,128)}', space=vmem, size = 0x9000, scoped, tag = 'internal scratch']
  #allocation2 [shape = 'f32[18,18,128]{2,1,0:T(8,128)}', space=vmem, size = 0x36000, scoped, tag = 'scratch operand']
  %s0 = inlined_call_operand.vmem [shape: f32[2,256,32], index: 0, kind: input, shape index: {}]
  %s1 = inlined_call_operand.vmem [shape: f32[32,128], index: 1, kind: input, shape index: {}]
  %s2 = inlined_call_operand.vmem [shape: f32[1,128], index: 2, kind: input, shape index: {}]
  %s3 = inlined_call_operand.vmem [shape: f32[9,128], index: 3, kind: input, shape index: {}]
  %s4 = inlined_call_operand.vmem [shape: f32[1,128], index: 4, kind: input, shape index: {}]
  %s5 = inlined_call_operand.vmem [shape: f32[64,128], index: 5, kind: input, shape index: {}]
  %s6 = inlined_call_operand.vmem [shape: f32[1,128], index: 6, kind: input, shape index: {}]
  %s7 = inlined_call_operand.hbm [shape: f32[2,256,128], index: 7, kind: output, shape index: {}]
  %s8 = sld [smem:[#allocation0]]
  $region61: #{tpu_custom_call.1} parent=0
    _
  %s10 = ssub.s32 1, %s8
  %s11 = scalar_select 0, %s10, %s8
  $region1: #{tpu_custom_call.1} parent=0
    #allocation3 [shape = 'u8[262144]{0}', space=vmem, size = 0x40000, scoped, tag = 'output window, operand 0']
    #allocation4 [shape = 's32[2]{0}', space=sflag, size = 0x8, scoped, tag = 'scoped memory for tpu_custom_call.1']
    %12 = vsyncpa [#allocation4], 0
    %s13 = scalar_lea.sflag [#allocation4], 1
    %14 = vsyncpa %s13, 0
    loop: start=0, step=1, limit=4
    $region2: #{tpu_custom_call.1} parent=1 // loop_pre_header
      _
    $region3: #{tpu_custom_call.1} parent=1 // loop_header
      %s16 = sphi 0, %s20
      %p17 = scmp.ge.s32.totalorder %s16, 4
      %s26 = sphi 0, %s28
      %s29 = sphi 0, %s26
      %s30 = sphi 0, %s29
      %s46 = sphi 0, %s30
      %s50 = sphi 0, %s50
      %s52 = sphi 0, %s50
      %s53 = sphi 0, %s52
      %s67 = sphi 0, %s53
      %s71 = sphi 0, %s71
      %s73 = sphi 0, %s71
      %s74 = sphi 0, %s73
      %s88 = sphi 0, %s74
      %s92 = sphi 0, %s92
      %s94 = sphi 0, %s92
      %s95 = sphi 0, %s94
      %s109 = sphi 0, %s95
      %s113 = sphi 0, %s113
      %s115 = sphi 0, %s113
      %s116 = sphi 0, %s115
      %s130 = sphi 0, %s116
      %s134 = sphi 0, %s134
      %s136 = sphi 0, %s134
      %s137 = sphi 0, %s136
      %s151 = sphi 0, %s137
      %s155 = sphi 0, %s155
      %s157 = sphi 0, %s155
      %s158 = sphi 0, %s157
      %s172 = sphi 0, %s158
      %s178 = sphi 0, %s180
      %s181 = sphi 0, %s178
      %s182 = sphi 0, %s181
      %s198 = sphi 0, %s182
    $region4: #{tpu_custom_call.1} parent=1 // loop_header_branch
      %19 = sbr.rel (%p17) target = $region8
    $region5: #{tpu_custom_call.1} parent=1 // loop_body
      %s21 = ssub.s32 %s16, 1
      %s22 = ssub.s32 %s16, 2
      %s23 = sadd.s32 %s16, 1
      %s24 = ssub.s32 %s16, %s23
      %p25 = scmp.eq.s32.totalorder %s24, 0
      %s27 = sadd.s32 %s26, 1
      %s28 = scalar_select %p25, %s26, %s27
      %p31 = pneg %p25
      %p32 = scmp.eq.s32.totalorder %s16, 1
      %p33 = por %p31, %p32
      %p34 = scmp.ne.s32.totalorder %s26, %s29
      %p35 = scmp.eq.s32.totalorder %s16, 0
      %p36 = por %p34, %p35
      %p37 = scmp.ne.s32.totalorder %s26, %s29
      %p38 = scmp.eq.s32.totalorder %s21, 1
      %p39 = por %p37, %p38
      %p40 = scmp.ne.s32.totalorder %s29, %s30
      %p41 = scmp.eq.s32.totalorder %s21, 0
      %p42 = por %p40, %p41
      %p43 = scmp.ne.s32.totalorder %s29, %s30
      %p44 = scmp.eq.s32.totalorder %s22, 1
      %p45 = por %p43, %p44
      %p47 = scmp.ne.s32.totalorder %s30, %s46
      %p48 = scmp.eq.s32.totalorder %s22, 0
      %p49 = por %p47, %p48
      %s51 = sadd.s32 %s50, 1
      %p54 = scmp.eq.s32.totalorder %s16, 1
      %p55 = scmp.ne.s32.totalorder %s50, %s52
      %p56 = scmp.eq.s32.totalorder %s16, 0
      %p57 = por %p55, %p56
      %p58 = scmp.ne.s32.totalorder %s50, %s52
      %p59 = scmp.eq.s32.totalorder %s21, 1
      %p60 = por %p58, %p59
      %p61 = scmp.ne.s32.totalorder %s52, %s53
      %p62 = scmp.eq.s32.totalorder %s21, 0
      %p63 = por %p61, %p62
      %p64 = scmp.ne.s32.totalorder %s52, %s53
      %p65 = scmp.eq.s32.totalorder %s22, 1
      %p66 = por %p64, %p65
      %p68 = scmp.ne.s32.totalorder %s53, %s67
      %p69 = scmp.eq.s32.totalorder %s22, 0
      %p70 = por %p68, %p69
      %s72 = sadd.s32 %s71, 1
      %p75 = scmp.eq.s32.totalorder %s16, 1
      %p76 = scmp.ne.s32.totalorder %s71, %s73
      %p77 = scmp.eq.s32.totalorder %s16, 0
      %p78 = por %p76, %p77
      %p79 = scmp.ne.s32.totalorder %s71, %s73
      %p80 = scmp.eq.s32.totalorder %s21, 1
      %p81 = por %p79, %p80
      %p82 = scmp.ne.s32.totalorder %s73, %s74
      %p83 = scmp.eq.s32.totalorder %s21, 0
      %p84 = por %p82, %p83
      %p85 = scmp.ne.s32.totalorder %s73, %s74
      %p86 = scmp.eq.s32.totalorder %s22, 1
      %p87 = por %p85, %p86
      %p89 = scmp.ne.s32.totalorder %s74, %s88
      %p90 = scmp.eq.s32.totalorder %s22, 0
      %p91 = por %p89, %p90
      %s93 = sadd.s32 %s92, 1
      %p96 = scmp.eq.s32.totalorder %s16, 1
      %p97 = scmp.ne.s32.totalorder %s92, %s94
      %p98 = scmp.eq.s32.totalorder %s16, 0
      %p99 = por %p97, %p98
      %p100 = scmp.ne.s32.totalorder %s92, %s94
      %p101 = scmp.eq.s32.totalorder %s21, 1
      %p102 = por %p100, %p101
      %p103 = scmp.ne.s32.totalorder %s94, %s95
      %p104 = scmp.eq.s32.totalorder %s21, 0
      %p105 = por %p103, %p104
      %p106 = scmp.ne.s32.totalorder %s94, %s95
      %p107 = scmp.eq.s32.totalorder %s22, 1
      %p108 = por %p106, %p107
      %p110 = scmp.ne.s32.totalorder %s95, %s109
      %p111 = scmp.eq.s32.totalorder %s22, 0
      %p112 = por %p110, %p111
      %s114 = sadd.s32 %s113, 1
      %p117 = scmp.eq.s32.totalorder %s16, 1
      %p118 = scmp.ne.s32.totalorder %s113, %s115
      %p119 = scmp.eq.s32.totalorder %s16, 0
      %p120 = por %p118, %p119
      %p121 = scmp.ne.s32.totalorder %s113, %s115
      %p122 = scmp.eq.s32.totalorder %s21, 1
      %p123 = por %p121, %p122
      %p124 = scmp.ne.s32.totalorder %s115, %s116
      %p125 = scmp.eq.s32.totalorder %s21, 0
      %p126 = por %p124, %p125
      %p127 = scmp.ne.s32.totalorder %s115, %s116
      %p128 = scmp.eq.s32.totalorder %s22, 1
      %p129 = por %p127, %p128
      %p131 = scmp.ne.s32.totalorder %s116, %s130
      %p132 = scmp.eq.s32.totalorder %s22, 0
      %p133 = por %p131, %p132
      %s135 = sadd.s32 %s134, 1
      %p138 = scmp.eq.s32.totalorder %s16, 1
      %p139 = scmp.ne.s32.totalorder %s134, %s136
      %p140 = scmp.eq.s32.totalorder %s16, 0
      %p141 = por %p139, %p140
      %p142 = scmp.ne.s32.totalorder %s134, %s136
      %p143 = scmp.eq.s32.totalorder %s21, 1
      %p144 = por %p142, %p143
      %p145 = scmp.ne.s32.totalorder %s136, %s137
      %p146 = scmp.eq.s32.totalorder %s21, 0
      %p147 = por %p145, %p146
      %p148 = scmp.ne.s32.totalorder %s136, %s137
      %p149 = scmp.eq.s32.totalorder %s22, 1
      %p150 = por %p148, %p149
      %p152 = scmp.ne.s32.totalorder %s137, %s151
      %p153 = scmp.eq.s32.totalorder %s22, 0
      %p154 = por %p152, %p153
      %s156 = sadd.s32 %s155, 1
      %p159 = scmp.eq.s32.totalorder %s16, 1
      %p160 = scmp.ne.s32.totalorder %s155, %s157
      %p161 = scmp.eq.s32.totalorder %s16, 0
      %p162 = por %p160, %p161
      %p163 = scmp.ne.s32.totalorder %s155, %s157
      %p164 = scmp.eq.s32.totalorder %s21, 1
      %p165 = por %p163, %p164
      %p166 = scmp.ne.s32.totalorder %s157, %s158
      %p167 = scmp.eq.s32.totalorder %s21, 0
      %p168 = por %p166, %p167
      %p169 = scmp.ne.s32.totalorder %s157, %s158
      %p170 = scmp.eq.s32.totalorder %s22, 1
      %p171 = por %p169, %p170
      %p173 = scmp.ne.s32.totalorder %s158, %s172
      %p174 = scmp.eq.s32.totalorder %s22, 0
      %p175 = por %p173, %p174
      %s176 = ssub.s32 %s16, %s23
      %p177 = scmp.eq.s32.totalorder %s176, 0
      %s179 = sadd.s32 %s178, 1
      %s180 = scalar_select %p177, %s178, %s179
      %p183 = pneg %p177
      %p184 = scmp.eq.s32.totalorder %s16, 1
      %p185 = por %p183, %p184
      %p186 = scmp.ne.s32.totalorder %s178, %s181
      %p187 = scmp.eq.s32.totalorder %s16, 0
      %p188 = por %p186, %p187
      %p189 = scmp.ne.s32.totalorder %s178, %s181
      %p190 = scmp.eq.s32.totalorder %s21, 1
      %p191 = por %p189, %p190
      %p192 = scmp.ne.s32.totalorder %s181, %s182
      %p193 = scmp.eq.s32.totalorder %s21, 0
      %p194 = por %p192, %p193
      %p195 = scmp.ne.s32.totalorder %s181, %s182
      %p196 = scmp.eq.s32.totalorder %s22, 1
      %p197 = por %p195, %p196
      %p199 = scmp.ne.s32.totalorder %s182, %s198
      %p200 = scmp.eq.s32.totalorder %s22, 0
      %p201 = por %p199, %p200
      %p202 = scmp.le.s32.totalorder 1, %s16
      %p203 = scmp.lt.s32.totalorder %s16, 3
      %p204 = pnand %p202, %p203
      %p205 = pneg %p204
      // Predicated region
      $region9: #{tpu_custom_call.1} parent=5 // pred_check
        _
      $region10: #{tpu_custom_call.1} parent=5 // pred_check_branch
        %207 = sbr.rel (%p204) target = $region12
      $region11: #{tpu_custom_call.1} parent=5 // pred_region
        %s208 = ssub.s32 %s16, 1
        // Predicated region
        $region13: #{tpu_custom_call.1} parent=11 // pred_check
          %p209 = pneg %p63
        $region14: #{tpu_custom_call.1} parent=11 // pred_check_branch
          %211 = sbr.rel (%p209) target = $region16
        $region15: #{tpu_custom_call.1} parent=11 // pred_region
          _
        $region16: #{tpu_custom_call.1} parent=11 // pred_fallthru
          _
        // Predicated region
        $region17: #{tpu_custom_call.1} parent=11 // pred_check
          %p212 = pneg %p84
        $region18: #{tpu_custom_call.1} parent=11 // pred_check_branch
          %214 = sbr.rel (%p212) target = $region20
        $region19: #{tpu_custom_call.1} parent=11 // pred_region
          _
        $region20: #{tpu_custom_call.1} parent=11 // pred_fallthru
          _
        // Predicated region
        $region21: #{tpu_custom_call.1} parent=11 // pred_check
          %p215 = pneg %p105
        $region22: #{tpu_custom_call.1} parent=11 // pred_check_branch
          %217 = sbr.rel (%p215) target = $region24
        $region23: #{tpu_custom_call.1} parent=11 // pred_region
          _
        $region24: #{tpu_custom_call.1} parent=11 // pred_fallthru
          _
        // Predicated region
        $region25: #{tpu_custom_call.1} parent=11 // pred_check
          %p218 = pneg %p126
        $region26: #{tpu_custom_call.1} parent=11 // pred_check_branch
          %220 = sbr.rel (%p218) target = $region28
        $region27: #{tpu_custom_call.1} parent=11 // pred_region
          _
        $region28: #{tpu_custom_call.1} parent=11 // pred_fallthru
          _
        // Predicated region
        $region29: #{tpu_custom_call.1} parent=11 // pred_check
          %p221 = pneg %p147
        $region30: #{tpu_custom_call.1} parent=11 // pred_check_branch
          %223 = sbr.rel (%p221) target = $region32
        $region31: #{tpu_custom_call.1} parent=11 // pred_region
          _
        $region32: #{tpu_custom_call.1} parent=11 // pred_fallthru
          _
        // Predicated region
        $region33: #{tpu_custom_call.1} parent=11 // pred_check
          %p224 = pneg %p168
        $region34: #{tpu_custom_call.1} parent=11 // pred_check_branch
          %226 = sbr.rel (%p224) target = $region36
        $region35: #{tpu_custom_call.1} parent=11 // pred_region
          _
        $region36: #{tpu_custom_call.1} parent=11 // pred_fallthru
          _
      $region12: #{tpu_custom_call.1} parent=5 // pred_fallthru
        _
      %p227 = scmp.lt.s32.totalorder %s16, 2
      // Predicated region
      $region37: #{tpu_custom_call.1} parent=5 // pred_check
        %p228 = pneg %p227
      $region38: #{tpu_custom_call.1} parent=5 // pred_check_branch
        %230 = sbr.rel (%p228) target = $region40
      $region39: #{tpu_custom_call.1} parent=5 // pred_region
        // Predicated region
        $region41: #{tpu_custom_call.1} parent=39 // pred_check
          %p231 = pneg %p36
        $region42: #{tpu_custom_call.1} parent=39 // pred_check_branch
          %233 = sbr.rel (%p231) target = $region44
        $region43: #{tpu_custom_call.1} parent=39 // pred_region
          %p234 = scmp.lt.s32.totalorder %s16, 1
          %s235 = scalar_select %p234, %s16, 1
          %s236 = smul.addr %s235, 32
          %s237 = smul.addr %s236, 8
          %s238 = scalar_lea.vmem %s0, %s237
        $region44: #{tpu_custom_call.1} parent=39 // pred_fallthru
          _
      $region40: #{tpu_custom_call.1} parent=5 // pred_fallthru
        _
      %p239 = scmp.le.s32.totalorder 1, %s16
      %p240 = scmp.lt.s32.totalorder %s16, 3
      %p241 = pnand %p239, %p240
      %p242 = pneg %p241
      // Predicated region
      $region45: #{tpu_custom_call.1} parent=5 // pred_check
        _
      $region46: #{tpu_custom_call.1} parent=5 // pred_check_branch
        %244 = sbr.rel (%p241) target = $region48
      $region47: #{tpu_custom_call.1} parent=5 // pred_region
        %s245 = ssub.s32 %s16, 1
        %p246 = scmp.lt.s32.totalorder %s21, 1
        %s247 = scalar_select %p246, %s21, 1
        %s248 = smul.addr %s247, 32
        %s249 = smul.addr %s248, 8
        %s250 = scalar_lea.vmem %s0, %s249
        %p251 = pneg %p42
        %p252 = pneg %p39
        %p253 = pneg %p63
        %p254 = pneg %p60
        %p255 = pneg %p84
        %p256 = pneg %p81
        %p257 = pneg %p105
        %p258 = pneg %p102
        %p259 = pneg %p126
        %p260 = pneg %p123
        %p261 = pneg %p147
        %p262 = pneg %p144
        %p263 = pneg %p168
        %p264 = pneg %p165
        %p265 = pneg %p194
        %p266 = pneg %p191
        %s267 = sand.u32 %s181, 1
        %s268 = scalar_lea.sflag [#allocation4], %s267
        %s269 = sand.u32 %s181, 1
        %s270 = smul.addr %s269, 256
        %s271 = scalar_lea.vmem [#allocation3], %s270
        %p272 = scmp.lt.s32.totalorder %s21, 1
        %s273 = scalar_select %p272, %s21, 1
        %s274 = smul.addr %s273, 32
        %s275 = smul.addr %s274, 8
        %s276 = scalar_lea.vmem %s0, %s275
        %v277 = vld [vmem:[%s276] sm:$0xff]
        %v278 = vld [vmem:[%s276 + $0x8] sm:$0xff]
        %v279 = vld [vmem:[%s276 + $0x10] sm:$0xff]
        %v280 = vld [vmem:[%s276 + $0x18] sm:$0xff]
        %v281 = vld [vmem:[%s276 + $0x20] sm:$0xff]
        %v282 = vld [vmem:[%s276 + $0x28] sm:$0xff]
        %v283 = vld [vmem:[%s276 + $0x30] sm:$0xff]
        %v284 = vld [vmem:[%s276 + $0x38] sm:$0xff]
        %v285 = vld [vmem:[%s276 + $0x40] sm:$0xff]
        %v286 = vld [vmem:[%s276 + $0x48] sm:$0xff]
        %v287 = vld [vmem:[%s276 + $0x50] sm:$0xff]
        %v288 = vld [vmem:[%s276 + $0x58] sm:$0xff]
        %v289 = vld [vmem:[%s276 + $0x60] sm:$0xff]
        %v290 = vld [vmem:[%s276 + $0x68] sm:$0xff]
        %v291 = vld [vmem:[%s276 + $0x70] sm:$0xff]
        %v292 = vld [vmem:[%s276 + $0x78] sm:$0xff]
        %v293 = vld [vmem:[%s276 + $0x80] sm:$0xff]
        %v294 = vld [vmem:[%s276 + $0x88] sm:$0xff]
        %v295 = vld [vmem:[%s276 + $0x90] sm:$0xff]
        %v296 = vld [vmem:[%s276 + $0x98] sm:$0xff]
        %v297 = vld [vmem:[%s276 + $0xa0] sm:$0xff]
        %v298 = vld [vmem:[%s276 + $0xa8] sm:$0xff]
        %v299 = vld [vmem:[%s276 + $0xb0] sm:$0xff]
        %v300 = vld [vmem:[%s276 + $0xb8] sm:$0xff]
        %v301 = vld [vmem:[%s276 + $0xc0] sm:$0xff]
        %v302 = vld [vmem:[%s276 + $0xc8] sm:$0xff]
        %v303 = vld [vmem:[%s276 + $0xd0] sm:$0xff]
        %v304 = vld [vmem:[%s276 + $0xd8] sm:$0xff]
        %v305 = vld [vmem:[%s276 + $0xe0] sm:$0xff]
        %v306 = vld [vmem:[%s276 + $0xe8] sm:$0xff]
        %v307 = vld [vmem:[%s276 + $0xf0] sm:$0xff]
        %v308 = vld [vmem:[%s276 + $0xf8] sm:$0xff]
        %v309 = vld [vmem:[%s1] sm:$0xff]
        %v310 = vld [vmem:[%s1 + $0x8] sm:$0xff]
        %v311 = vld [vmem:[%s1 + $0x10] sm:$0xff]
        %v312 = vld [vmem:[%s1 + $0x18] sm:$0xff]
        %v313 = vld [vmem:[%s2] sm:$0x1]
        %v315 = vperm.slane %v313, 0
        %vm317 = vcmask 261120
        %v319 = vsel %vm317, %v277, 0
        %v322 = vsel %vm317, %v278, 0
        %v325 = vsel %vm317, %v279, 0
        %v328 = vsel %vm317, %v280, 0
        %v331 = vsel %vm317, %v281, 0
        %v334 = vsel %vm317, %v282, 0
        %v337 = vsel %vm317, %v283, 0
        %v340 = vsel %vm317, %v284, 0
        %v343 = vsel %vm317, %v285, 0
        %v346 = vsel %vm317, %v286, 0
        %v349 = vsel %vm317, %v287, 0
        %v352 = vsel %vm317, %v288, 0
        %v355 = vsel %vm317, %v289, 0
        %v358 = vsel %vm317, %v290, 0
        %v361 = vsel %vm317, %v291, 0
        %v364 = vsel %vm317, %v292, 0
        %v367 = vsel %vm317, %v293, 0
        %v370 = vsel %vm317, %v294, 0
        %v373 = vsel %vm317, %v295, 0
        %v376 = vsel %vm317, %v296, 0
        %v379 = vsel %vm317, %v297, 0
        %v382 = vsel %vm317, %v298, 0
        %v385 = vsel %vm317, %v299, 0
        %v388 = vsel %vm317, %v300, 0
        %v391 = vsel %vm317, %v301, 0
        %v394 = vsel %vm317, %v302, 0
        %v397 = vsel %vm317, %v303, 0
        %v400 = vsel %vm317, %v304, 0
        %v403 = vsel %vm317, %v305, 0
        %v406 = vsel %vm317, %v306, 0
        %v409 = vsel %vm317, %v307, 0
        %v412 = vsel %vm317, %v308, 0
        %414 = vmatpush.msra.mxu0 0.0
        %415 = vmatpush.msra.mxu0 0.0
        %416 = vmatpush.msra.mxu0 0.0
        %417 = vmatpush.msra.mxu0 0.0
        %418 = vmatpush.msra.mxu0 0.0
        %419 = vmatpush.msra.mxu0 0.0
        %420 = vmatpush.msra.mxu0 0.0
        %421 = vmatpush.msra.mxu0 0.0
        %422 = vmatpush.msra.mxu0 0.0
        %423 = vmatpush.msra.mxu0 0.0
        %424 = vmatpush.msra.mxu0 0.0
        %425 = vmatpush.msra.mxu0 0.0
        %426 = vmatpush.msra.mxu0 %v312
        %427 = vmatpush.msra.mxu0 %v311
        %428 = vmatpush.msra.mxu0 %v310
        %429 = vmatpush.msra.mxu0 %v309
        %430 = vmatmul.f32.gmra.mxu0 %v319
        %v431 = vpop.f32.mrf.mxu0
        %v432 = vadd.f32 %v315, %v431
        %433 = vmatmul.f32.gmra.mxu0 %v322
        %v434 = vpop.f32.mrf.mxu0
        %v435 = vadd.f32 %v315, %v434
        %436 = vmatmul.f32.gmra.mxu0 %v325
        %v437 = vpop.f32.mrf.mxu0
        %v438 = vadd.f32 %v315, %v437
        %439 = vmatmul.f32.gmra.mxu0 %v328
        %v440 = vpop.f32.mrf.mxu0
        %v441 = vadd.f32 %v315, %v440
        %442 = vmatmul.f32.gmra.mxu0 %v331
        %v443 = vpop.f32.mrf.mxu0
        %v444 = vadd.f32 %v315, %v443
        %445 = vmatmul.f32.gmra.mxu0 %v334
        %v446 = vpop.f32.mrf.mxu0
        %v447 = vadd.f32 %v315, %v446
        %448 = vmatmul.f32.gmra.mxu0 %v337
        %v449 = vpop.f32.mrf.mxu0
        %v450 = vadd.f32 %v315, %v449
        %451 = vmatmul.f32.gmra.mxu0 %v340
        %v452 = vpop.f32.mrf.mxu0
        %v453 = vadd.f32 %v315, %v452
        %454 = vmatmul.f32.gmra.mxu0 %v343
        %v455 = vpop.f32.mrf.mxu0
        %v456 = vadd.f32 %v315, %v455
        %457 = vmatmul.f32.gmra.mxu0 %v346
        %v458 = vpop.f32.mrf.mxu0
        %v459 = vadd.f32 %v315, %v458
        %460 = vmatmul.f32.gmra.mxu0 %v349
        %v461 = vpop.f32.mrf.mxu0
        %v462 = vadd.f32 %v315, %v461
        %463 = vmatmul.f32.gmra.mxu0 %v352
        %v464 = vpop.f32.mrf.mxu0
        %v465 = vadd.f32 %v315, %v464
        %466 = vmatmul.f32.gmra.mxu0 %v355
        %v467 = vpop.f32.mrf.mxu0
        %v468 = vadd.f32 %v315, %v467
        %469 = vmatmul.f32.gmra.mxu0 %v358
        %v470 = vpop.f32.mrf.mxu0
        %v471 = vadd.f32 %v315, %v470
        %472 = vmatmul.f32.gmra.mxu0 %v361
        %v473 = vpop.f32.mrf.mxu0
        %v474 = vadd.f32 %v315, %v473
        %475 = vmatmul.f32.gmra.mxu0 %v364
        %v476 = vpop.f32.mrf.mxu0
        %v477 = vadd.f32 %v315, %v476
        %478 = vmatmul.f32.gmra.mxu0 %v367
        %v479 = vpop.f32.mrf.mxu0
        %v480 = vadd.f32 %v315, %v479
        %481 = vmatmul.f32.gmra.mxu0 %v370
        %v482 = vpop.f32.mrf.mxu0
        %v483 = vadd.f32 %v315, %v482
        %484 = vmatmul.f32.gmra.mxu0 %v373
        %v485 = vpop.f32.mrf.mxu0
        %v486 = vadd.f32 %v315, %v485
        %487 = vmatmul.f32.gmra.mxu0 %v376
        %v488 = vpop.f32.mrf.mxu0
        %v489 = vadd.f32 %v315, %v488
        %490 = vmatmul.f32.gmra.mxu0 %v379
        %v491 = vpop.f32.mrf.mxu0
        %v492 = vadd.f32 %v315, %v491
        %493 = vmatmul.f32.gmra.mxu0 %v382
        %v494 = vpop.f32.mrf.mxu0
        %v495 = vadd.f32 %v315, %v494
        %496 = vmatmul.f32.gmra.mxu0 %v385
        %v497 = vpop.f32.mrf.mxu0
        %v498 = vadd.f32 %v315, %v497
        %499 = vmatmul.f32.gmra.mxu0 %v388
        %v500 = vpop.f32.mrf.mxu0
        %v501 = vadd.f32 %v315, %v500
        %502 = vmatmul.f32.gmra.mxu0 %v391
        %v503 = vpop.f32.mrf.mxu0
        %v504 = vadd.f32 %v315, %v503
        %505 = vmatmul.f32.gmra.mxu0 %v394
        %v506 = vpop.f32.mrf.mxu0
        %v507 = vadd.f32 %v315, %v506
        %508 = vmatmul.f32.gmra.mxu0 %v397
        %v509 = vpop.f32.mrf.mxu0
        %v510 = vadd.f32 %v315, %v509
        %511 = vmatmul.f32.gmra.mxu0 %v400
        %v512 = vpop.f32.mrf.mxu0
        %v513 = vadd.f32 %v315, %v512
        %514 = vmatmul.f32.gmra.mxu0 %v403
        %v515 = vpop.f32.mrf.mxu0
        %v516 = vadd.f32 %v315, %v515
        %517 = vmatmul.f32.gmra.mxu0 %v406
        %v518 = vpop.f32.mrf.mxu0
        %v519 = vadd.f32 %v315, %v518
        %520 = vmatmul.f32.gmra.mxu0 %v409
        %v521 = vpop.f32.mrf.mxu0
        %v522 = vadd.f32 %v315, %v521
        %523 = vmatmul.f32.gmra.mxu0 %v412
        %v524 = vpop.f32.mrf.mxu0
        %v525 = vadd.f32 %v315, %v524
        %526 = vdwg.mxu0
        %527 = vst [vmem:[#allocation2] sm:$0xff] 0.0
        %528 = vst [vmem:[#allocation2 + $0x8] sm:$0xff] 0.0
        %529 = vst [vmem:[#allocation2 + $0x10] sm:$0x3] 0.0
        %530 = vst [vmem:[#allocation2 + $0x18] sm:$0xff] 0.0
        %531 = vst [vmem:[#allocation2 + $0x20] sm:$0xff] 0.0
        %532 = vst [vmem:[#allocation2 + $0x28] sm:$0x3] 0.0
        %533 = vst [vmem:[#allocation2 + $0x30] sm:$0xff] 0.0
        %534 = vst [vmem:[#allocation2 + $0x38] sm:$0xff] 0.0
        %535 = vst [vmem:[#allocation2 + $0x40] sm:$0x3] 0.0
        %536 = vst [vmem:[#allocation2 + $0x48] sm:$0xff] 0.0
        %537 = vst [vmem:[#allocation2 + $0x50] sm:$0xff] 0.0
        %538 = vst [vmem:[#allocation2 + $0x58] sm:$0x3] 0.0
        %539 = vst [vmem:[#allocation2 + $0x60] sm:$0xff] 0.0
        %540 = vst [vmem:[#allocation2 + $0x68] sm:$0xff] 0.0
        %541 = vst [vmem:[#allocation2 + $0x70] sm:$0x3] 0.0
        %542 = vst [vmem:[#allocation2 + $0x78] sm:$0xff] 0.0
        %543 = vst [vmem:[#allocation2 + $0x80] sm:$0xff] 0.0
        %544 = vst [vmem:[#allocation2 + $0x88] sm:$0x3] 0.0
        %545 = vst [vmem:[#allocation2 + $0x90] sm:$0xff] 0.0
        %546 = vst [vmem:[#allocation2 + $0x98] sm:$0xff] 0.0
        %547 = vst [vmem:[#allocation2 + $0xa0] sm:$0x3] 0.0
        %548 = vst [vmem:[#allocation2 + $0xa8] sm:$0xff] 0.0
        %549 = vst [vmem:[#allocation2 + $0xb0] sm:$0xff] 0.0
        %550 = vst [vmem:[#allocation2 + $0xb8] sm:$0x3] 0.0
        %551 = vst [vmem:[#allocation2 + $0xc0] sm:$0xff] 0.0
        %552 = vst [vmem:[#allocation2 + $0xc8] sm:$0xff] 0.0
        %553 = vst [vmem:[#allocation2 + $0xd0] sm:$0x3] 0.0
        %554 = vst [vmem:[#allocation2 + $0xd8] sm:$0xff] 0.0
        %555 = vst [vmem:[#allocation2 + $0xe0] sm:$0xff] 0.0
        %556 = vst [vmem:[#allocation2 + $0xe8] sm:$0x3] 0.0
        %557 = vst [vmem:[#allocation2 + $0xf0] sm:$0xff] 0.0
        %558 = vst [vmem:[#allocation2 + $0xf8] sm:$0xff] 0.0
        %559 = vst [vmem:[#allocation2 + $0x100] sm:$0x3] 0.0
        %560 = vst [vmem:[#allocation2 + $0x108] sm:$0xff] 0.0
        %561 = vst [vmem:[#allocation2 + $0x110] sm:$0xff] 0.0
        %562 = vst [vmem:[#allocation2 + $0x118] sm:$0x3] 0.0
        %563 = vst [vmem:[#allocation2 + $0x120] sm:$0xff] 0.0
        %564 = vst [vmem:[#allocation2 + $0x128] sm:$0xff] 0.0
        %565 = vst [vmem:[#allocation2 + $0x130] sm:$0x3] 0.0
        %566 = vst [vmem:[#allocation2 + $0x138] sm:$0xff] 0.0
        %567 = vst [vmem:[#allocation2 + $0x140] sm:$0xff] 0.0
        %568 = vst [vmem:[#allocation2 + $0x148] sm:$0x3] 0.0
        %569 = vst [vmem:[#allocation2 + $0x150] sm:$0xff] 0.0
        %570 = vst [vmem:[#allocation2 + $0x158] sm:$0xff] 0.0
        %571 = vst [vmem:[#allocation2 + $0x160] sm:$0x3] 0.0
        %572 = vst [vmem:[#allocation2 + $0x168] sm:$0xff] 0.0
        %573 = vst [vmem:[#allocation2 + $0x170] sm:$0xff] 0.0
        %574 = vst [vmem:[#allocation2 + $0x178] sm:$0x3] 0.0
        %575 = vst [vmem:[#allocation2 + $0x180] sm:$0xff] 0.0
        %576 = vst [vmem:[#allocation2 + $0x188] sm:$0xff] 0.0
        %577 = vst [vmem:[#allocation2 + $0x190] sm:$0x3] 0.0
        %578 = vst [vmem:[#allocation2 + $0x198] sm:$0xff] 0.0
        %579 = vst [vmem:[#allocation2 + $0x1a0] sm:$0xff] 0.0
        %580 = vst [vmem:[#allocation2 + $0x1a8] sm:$0x3] 0.0
        %s581 = scalar_lea.vmem [#allocation2], 24
        %582 = vst [vmem:[%s581 + $0x1] sm:$0xff] %v432
        %583 = vst [vmem:[%s581 + $0x9] sm:$0xff] %v435
        %584 = vst [vmem:[%s581 + $0x19] sm:$0xff] %v438
        %585 = vst [vmem:[%s581 + $0x21] sm:$0xff] %v441
        %586 = vst [vmem:[%s581 + $0x31] sm:$0xff] %v444
        %587 = vst [vmem:[%s581 + $0x39] sm:$0xff] %v447
        %588 = vst [vmem:[%s581 + $0x49] sm:$0xff] %v450
        %589 = vst [vmem:[%s581 + $0x51] sm:$0xff] %v453
        %590 = vst [vmem:[%s581 + $0x61] sm:$0xff] %v456
        %591 = vst [vmem:[%s581 + $0x69] sm:$0xff] %v459
        %592 = vst [vmem:[%s581 + $0x79] sm:$0xff] %v462
        %593 = vst [vmem:[%s581 + $0x81] sm:$0xff] %v465
        %594 = vst [vmem:[%s581 + $0x91] sm:$0xff] %v468
        %595 = vst [vmem:[%s581 + $0x99] sm:$0xff] %v471
        %596 = vst [vmem:[%s581 + $0xa9] sm:$0xff] %v474
        %597 = vst [vmem:[%s581 + $0xb1] sm:$0xff] %v477
        %598 = vst [vmem:[%s581 + $0xc1] sm:$0xff] %v480
        %599 = vst [vmem:[%s581 + $0xc9] sm:$0xff] %v483
        %600 = vst [vmem:[%s581 + $0xd9] sm:$0xff] %v486
        %601 = vst [vmem:[%s581 + $0xe1] sm:$0xff] %v489
        %602 = vst [vmem:[%s581 + $0xf1] sm:$0xff] %v492
        %603 = vst [vmem:[%s581 + $0xf9] sm:$0xff] %v495
        %604 = vst [vmem:[%s581 + $0x109] sm:$0xff] %v498
        %605 = vst [vmem:[%s581 + $0x111] sm:$0xff] %v501
        %606 = vst [vmem:[%s581 + $0x121] sm:$0xff] %v504
        %607 = vst [vmem:[%s581 + $0x129] sm:$0xff] %v507
        %608 = vst [vmem:[%s581 + $0x139] sm:$0xff] %v510
        %609 = vst [vmem:[%s581 + $0x141] sm:$0xff] %v513
        %610 = vst [vmem:[%s581 + $0x151] sm:$0xff] %v516
        %611 = vst [vmem:[%s581 + $0x159] sm:$0xff] %v519
        %612 = vst [vmem:[%s581 + $0x169] sm:$0xff] %v522
        %613 = vst [vmem:[%s581 + $0x171] sm:$0xff] %v525
        %v614 = vld [vmem:[%s3] sm:$0xff]
        %v615 = vld [vmem:[%s3 + $0x8] sm:$0x1]
        %v616 = vld [vmem:[#allocation2] sm:$0xff]
        %v617 = vld [vmem:[#allocation2 + $0x8] sm:$0xff]
        %v618 = vld [vmem:[#allocation2 + $0x18] sm:$0xff]
        %v619 = vld [vmem:[#allocation2 + $0x20] sm:$0xff]
        %v620 = vld [vmem:[#allocation2 + $0x30] sm:$0xff]
        %v621 = vld [vmem:[#allocation2 + $0x38] sm:$0xff]
        %v622 = vld [vmem:[#allocation2 + $0x48] sm:$0xff]
        %v623 = vld [vmem:[#allocation2 + $0x50] sm:$0xff]
        %v624 = vld [vmem:[#allocation2 + $0x60] sm:$0xff]
        %v625 = vld [vmem:[#allocation2 + $0x68] sm:$0xff]
        %v626 = vld [vmem:[#allocation2 + $0x78] sm:$0xff]
        %v627 = vld [vmem:[#allocation2 + $0x80] sm:$0xff]
        %v628 = vld [vmem:[#allocation2 + $0x90] sm:$0xff]
        %v629 = vld [vmem:[#allocation2 + $0x98] sm:$0xff]
        %v630 = vld [vmem:[#allocation2 + $0xa8] sm:$0xff]
        %v631 = vld [vmem:[#allocation2 + $0xb0] sm:$0xff]
        %v632 = vld [vmem:[#allocation2 + $0xc0] sm:$0xff]
        %v633 = vld [vmem:[#allocation2 + $0xc8] sm:$0xff]
        %v634 = vld [vmem:[#allocation2 + $0xd8] sm:$0xff]
        %v635 = vld [vmem:[#allocation2 + $0xe0] sm:$0xff]
        %v636 = vld [vmem:[#allocation2 + $0xf0] sm:$0xff]
        %v637 = vld [vmem:[#allocation2 + $0xf8] sm:$0xff]
        %v638 = vld [vmem:[#allocation2 + $0x108] sm:$0xff]
        %v639 = vld [vmem:[#allocation2 + $0x110] sm:$0xff]
        %v640 = vld [vmem:[#allocation2 + $0x120] sm:$0xff]
        %v641 = vld [vmem:[#allocation2 + $0x128] sm:$0xff]
        %v642 = vld [vmem:[#allocation2 + $0x138] sm:$0xff]
        %v643 = vld [vmem:[#allocation2 + $0x140] sm:$0xff]
        %v644 = vld [vmem:[#allocation2 + $0x150] sm:$0xff]
        %v645 = vld [vmem:[#allocation2 + $0x158] sm:$0xff]
        %v646 = vld [vmem:[#allocation2 + $0x168] sm:$0xff]
        %v647 = vld [vmem:[#allocation2 + $0x170] sm:$0xff]
        %v648 = vperm.slane %v614, 0
        %v649 = vmul.f32 %v616, %v648
        %v650 = vmul.f32 %v617, %v648
        %v651 = vmul.f32 %v618, %v648
        %v652 = vmul.f32 %v619, %v648
        %v653 = vmul.f32 %v620, %v648
        %v654 = vmul.f32 %v621, %v648
        %v655 = vmul.f32 %v622, %v648
        %v656 = vmul.f32 %v623, %v648
        %v657 = vmul.f32 %v624, %v648
        %v658 = vmul.f32 %v625, %v648
        %v659 = vmul.f32 %v626, %v648
        %v660 = vmul.f32 %v627, %v648
        %v661 = vmul.f32 %v628, %v648
        %v662 = vmul.f32 %v629, %v648
        %v663 = vmul.f32 %v630, %v648
        %v664 = vmul.f32 %v631, %v648
        %v665 = vmul.f32 %v632, %v648
        %v666 = vmul.f32 %v633, %v648
        %v667 = vmul.f32 %v634, %v648
        %v668 = vmul.f32 %v635, %v648
        %v669 = vmul.f32 %v636, %v648
        %v670 = vmul.f32 %v637, %v648
        %v671 = vmul.f32 %v638, %v648
        %v672 = vmul.f32 %v639, %v648
        %v673 = vmul.f32 %v640, %v648
        %v674 = vmul.f32 %v641, %v648
        %v675 = vmul.f32 %v642, %v648
        %v676 = vmul.f32 %v643, %v648
        %v677 = vmul.f32 %v644, %v648
        %v678 = vmul.f32 %v645, %v648
        %v679 = vmul.f32 %v646, %v648
        %v680 = vmul.f32 %v647, %v648
        %v681 = vadd.f32 %v649, 0.0
        %v682 = vadd.f32 %v650, 0.0
        %v683 = vadd.f32 %v651, 0.0
        %v684 = vadd.f32 %v652, 0.0
        %v685 = vadd.f32 %v653, 0.0
        %v686 = vadd.f32 %v654, 0.0
        %v687 = vadd.f32 %v655, 0.0
        %v688 = vadd.f32 %v656, 0.0
        %v689 = vadd.f32 %v657, 0.0
        %v690 = vadd.f32 %v658, 0.0
        %v691 = vadd.f32 %v659, 0.0
        %v692 = vadd.f32 %v660, 0.0
        %v693 = vadd.f32 %v661, 0.0
        %v694 = vadd.f32 %v662, 0.0
        %v695 = vadd.f32 %v663, 0.0
        %v696 = vadd.f32 %v664, 0.0
        %v697 = vadd.f32 %v665, 0.0
        %v698 = vadd.f32 %v666, 0.0
        %v699 = vadd.f32 %v667, 0.0
        %v700 = vadd.f32 %v668, 0.0
        %v701 = vadd.f32 %v669, 0.0
        %v702 = vadd.f32 %v670, 0.0
        %v703 = vadd.f32 %v671, 0.0
        %v704 = vadd.f32 %v672, 0.0
        %v705 = vadd.f32 %v673, 0.0
        %v706 = vadd.f32 %v674, 0.0
        %v707 = vadd.f32 %v675, 0.0
        %v708 = vadd.f32 %v676, 0.0
        %v709 = vadd.f32 %v677, 0.0
        %v710 = vadd.f32 %v678, 0.0
        %v711 = vadd.f32 %v679, 0.0
        %v712 = vadd.f32 %v680, 0.0
        %v713 = vld [vmem:[#allocation2 + $0x1] sm:$0xff]
        %v714 = vld [vmem:[#allocation2 + $0x9] sm:$0xff]
        %v715 = vld [vmem:[#allocation2 + $0x19] sm:$0xff]
        %v716 = vld [vmem:[#allocation2 + $0x21] sm:$0xff]
        %v717 = vld [vmem:[#allocation2 + $0x31] sm:$0xff]
        %v718 = vld [vmem:[#allocation2 + $0x39] sm:$0xff]
        %v719 = vld [vmem:[#allocation2 + $0x49] sm:$0xff]
        %v720 = vld [vmem:[#allocation2 + $0x51] sm:$0xff]
        %v721 = vld [vmem:[#allocation2 + $0x61] sm:$0xff]
        %v722 = vld [vmem:[#allocation2 + $0x69] sm:$0xff]
        %v723 = vld [vmem:[#allocation2 + $0x79] sm:$0xff]
        %v724 = vld [vmem:[#allocation2 + $0x81] sm:$0xff]
        %v725 = vld [vmem:[#allocation2 + $0x91] sm:$0xff]
        %v726 = vld [vmem:[#allocation2 + $0x99] sm:$0xff]
        %v727 = vld [vmem:[#allocation2 + $0xa9] sm:$0xff]
        %v728 = vld [vmem:[#allocation2 + $0xb1] sm:$0xff]
        %v729 = vld [vmem:[#allocation2 + $0xc1] sm:$0xff]
        %v730 = vld [vmem:[#allocation2 + $0xc9] sm:$0xff]
        %v731 = vld [vmem:[#allocation2 + $0xd9] sm:$0xff]
        %v732 = vld [vmem:[#allocation2 + $0xe1] sm:$0xff]
        %v733 = vld [vmem:[#allocation2 + $0xf1] sm:$0xff]
        %v734 = vld [vmem:[#allocation2 + $0xf9] sm:$0xff]
        %v735 = vld [vmem:[#allocation2 + $0x109] sm:$0xff]
        %v736 = vld [vmem:[#allocation2 + $0x111] sm:$0xff]
        %v737 = vld [vmem:[#allocation2 + $0x121] sm:$0xff]
        %v738 = vld [vmem:[#allocation2 + $0x129] sm:$0xff]
        %v739 = vld [vmem:[#allocation2 + $0x139] sm:$0xff]
        %v740 = vld [vmem:[#allocation2 + $0x141] sm:$0xff]
        %v741 = vld [vmem:[#allocation2 + $0x151] sm:$0xff]
        %v742 = vld [vmem:[#allocation2 + $0x159] sm:$0xff]
        %v743 = vld [vmem:[#allocation2 + $0x169] sm:$0xff]
        %v744 = vld [vmem:[#allocation2 + $0x171] sm:$0xff]
        %v745 = vperm.slane %v614, 1
        %v746 = vmul.f32 %v713, %v745
        %v747 = vmul.f32 %v714, %v745
        %v748 = vmul.f32 %v715, %v745
        %v749 = vmul.f32 %v716, %v745
        %v750 = vmul.f32 %v717, %v745
        %v751 = vmul.f32 %v718, %v745
        %v752 = vmul.f32 %v719, %v745
        %v753 = vmul.f32 %v720, %v745
        %v754 = vmul.f32 %v721, %v745
        %v755 = vmul.f32 %v722, %v745
        %v756 = vmul.f32 %v723, %v745
        %v757 = vmul.f32 %v724, %v745
        %v758 = vmul.f32 %v725, %v745
        %v759 = vmul.f32 %v726, %v745
        %v760 = vmul.f32 %v727, %v745
        %v761 = vmul.f32 %v728, %v745
        %v762 = vmul.f32 %v729, %v745
        %v763 = vmul.f32 %v730, %v745
        %v764 = vmul.f32 %v731, %v745
        %v765 = vmul.f32 %v732, %v745
        %v766 = vmul.f32 %v733, %v745
        %v767 = vmul.f32 %v734, %v745
        %v768 = vmul.f32 %v735, %v745
        %v769 = vmul.f32 %v736, %v745
        %v770 = vmul.f32 %v737, %v745
        %v771 = vmul.f32 %v738, %v745
        %v772 = vmul.f32 %v739, %v745
        %v773 = vmul.f32 %v740, %v745
        %v774 = vmul.f32 %v741, %v745
        %v775 = vmul.f32 %v742, %v745
        %v776 = vmul.f32 %v743, %v745
        %v777 = vmul.f32 %v744, %v745
        %v778 = vadd.f32 %v681, %v746
        %v779 = vadd.f32 %v682, %v747
        %v780 = vadd.f32 %v683, %v748
        %v781 = vadd.f32 %v684, %v749
        %v782 = vadd.f32 %v685, %v750
        %v783 = vadd.f32 %v686, %v751
        %v784 = vadd.f32 %v687, %v752
        %v785 = vadd.f32 %v688, %v753
        %v786 = vadd.f32 %v689, %v754
        %v787 = vadd.f32 %v690, %v755
        %v788 = vadd.f32 %v691, %v756
        %v789 = vadd.f32 %v692, %v757
        %v790 = vadd.f32 %v693, %v758
        %v791 = vadd.f32 %v694, %v759
        %v792 = vadd.f32 %v695, %v760
        %v793 = vadd.f32 %v696, %v761
        %v794 = vadd.f32 %v697, %v762
        %v795 = vadd.f32 %v698, %v763
        %v796 = vadd.f32 %v699, %v764
        %v797 = vadd.f32 %v700, %v765
        %v798 = vadd.f32 %v701, %v766
        %v799 = vadd.f32 %v702, %v767
        %v800 = vadd.f32 %v703, %v768
        %v801 = vadd.f32 %v704, %v769
        %v802 = vadd.f32 %v705, %v770
        %v803 = vadd.f32 %v706, %v771
        %v804 = vadd.f32 %v707, %v772
        %v805 = vadd.f32 %v708, %v773
        %v806 = vadd.f32 %v709, %v774
        %v807 = vadd.f32 %v710, %v775
        %v808 = vadd.f32 %v711, %v776
        %v809 = vadd.f32 %v712, %v777
        %v810 = vld [vmem:[#allocation2 + $0x2] sm:$0xff]
        %v811 = vld [vmem:[#allocation2 + $0xa] sm:$0xff]
        %v812 = vld [vmem:[#allocation2 + $0x1a] sm:$0xff]
        %v813 = vld [vmem:[#allocation2 + $0x22] sm:$0xff]
        %v814 = vld [vmem:[#allocation2 + $0x32] sm:$0xff]
        %v815 = vld [vmem:[#allocation2 + $0x3a] sm:$0xff]
        %v816 = vld [vmem:[#allocation2 + $0x4a] sm:$0xff]
        %v817 = vld [vmem:[#allocation2 + $0x52] sm:$0xff]
        %v818 = vld [vmem:[#allocation2 + $0x62] sm:$0xff]
        %v819 = vld [vmem:[#allocation2 + $0x6a] sm:$0xff]
        %v820 = vld [vmem:[#allocation2 + $0x7a] sm:$0xff]
        %v821 = vld [vmem:[#allocation2 + $0x82] sm:$0xff]
        %v822 = vld [vmem:[#allocation2 + $0x92] sm:$0xff]
        %v823 = vld [vmem:[#allocation2 + $0x9a] sm:$0xff]
        %v824 = vld [vmem:[#allocation2 + $0xaa] sm:$0xff]
        %v825 = vld [vmem:[#allocation2 + $0xb2] sm:$0xff]
        %v826 = vld [vmem:[#allocation2 + $0xc2] sm:$0xff]
        %v827 = vld [vmem:[#allocation2 + $0xca] sm:$0xff]
        %v828 = vld [vmem:[#allocation2 + $0xda] sm:$0xff]
        %v829 = vld [vmem:[#allocation2 + $0xe2] sm:$0xff]
        %v830 = vld [vmem:[#allocation2 + $0xf2] sm:$0xff]
        %v831 = vld [vmem:[#allocation2 + $0xfa] sm:$0xff]
        %v832 = vld [vmem:[#allocation2 + $0x10a] sm:$0xff]
        %v833 = vld [vmem:[#allocation2 + $0x112] sm:$0xff]
        %v834 = vld [vmem:[#allocation2 + $0x122] sm:$0xff]
        %v835 = vld [vmem:[#allocation2 + $0x12a] sm:$0xff]
        %v836 = vld [vmem:[#allocation2 + $0x13a] sm:$0xff]
        %v837 = vld [vmem:[#allocation2 + $0x142] sm:$0xff]
        %v838 = vld [vmem:[#allocation2 + $0x152] sm:$0xff]
        %v839 = vld [vmem:[#allocation2 + $0x15a] sm:$0xff]
        %v840 = vld [vmem:[#allocation2 + $0x16a] sm:$0xff]
        %v841 = vld [vmem:[#allocation2 + $0x172] sm:$0xff]
        %v842 = vperm.slane %v614, 2
        %v843 = vmul.f32 %v810, %v842
        %v844 = vmul.f32 %v811, %v842
        %v845 = vmul.f32 %v812, %v842
        %v846 = vmul.f32 %v813, %v842
        %v847 = vmul.f32 %v814, %v842
        %v848 = vmul.f32 %v815, %v842
        %v849 = vmul.f32 %v816, %v842
        %v850 = vmul.f32 %v817, %v842
        %v851 = vmul.f32 %v818, %v842
        %v852 = vmul.f32 %v819, %v842
        %v853 = vmul.f32 %v820, %v842
        %v854 = vmul.f32 %v821, %v842
        %v855 = vmul.f32 %v822, %v842
        %v856 = vmul.f32 %v823, %v842
        %v857 = vmul.f32 %v824, %v842
        %v858 = vmul.f32 %v825, %v842
        %v859 = vmul.f32 %v826, %v842
        %v860 = vmul.f32 %v827, %v842
        %v861 = vmul.f32 %v828, %v842
        %v862 = vmul.f32 %v829, %v842
        %v863 = vmul.f32 %v830, %v842
        %v864 = vmul.f32 %v831, %v842
        %v865 = vmul.f32 %v832, %v842
        %v866 = vmul.f32 %v833, %v842
        %v867 = vmul.f32 %v834, %v842
        %v868 = vmul.f32 %v835, %v842
        %v869 = vmul.f32 %v836, %v842
        %v870 = vmul.f32 %v837, %v842
        %v871 = vmul.f32 %v838, %v842
        %v872 = vmul.f32 %v839, %v842
        %v873 = vmul.f32 %v840, %v842
        %v874 = vmul.f32 %v841, %v842
        %v875 = vadd.f32 %v778, %v843
        %v876 = vadd.f32 %v779, %v844
        %v877 = vadd.f32 %v780, %v845
        %v878 = vadd.f32 %v781, %v846
        %v879 = vadd.f32 %v782, %v847
        %v880 = vadd.f32 %v783, %v848
        %v881 = vadd.f32 %v784, %v849
        %v882 = vadd.f32 %v785, %v850
        %v883 = vadd.f32 %v786, %v851
        %v884 = vadd.f32 %v787, %v852
        %v885 = vadd.f32 %v788, %v853
        %v886 = vadd.f32 %v789, %v854
        %v887 = vadd.f32 %v790, %v855
        %v888 = vadd.f32 %v791, %v856
        %v889 = vadd.f32 %v792, %v857
        %v890 = vadd.f32 %v793, %v858
        %v891 = vadd.f32 %v794, %v859
        %v892 = vadd.f32 %v795, %v860
        %v893 = vadd.f32 %v796, %v861
        %v894 = vadd.f32 %v797, %v862
        %v895 = vadd.f32 %v798, %v863
        %v896 = vadd.f32 %v799, %v864
        %v897 = vadd.f32 %v800, %v865
        %v898 = vadd.f32 %v801, %v866
        %v899 = vadd.f32 %v802, %v867
        %v900 = vadd.f32 %v803, %v868
        %v901 = vadd.f32 %v804, %v869
        %v902 = vadd.f32 %v805, %v870
        %v903 = vadd.f32 %v806, %v871
        %v904 = vadd.f32 %v807, %v872
        %v905 = vadd.f32 %v808, %v873
        %v906 = vadd.f32 %v809, %v874
        %v907 = vld [vmem:[%s581] sm:$0xff]
        %v908 = vld [vmem:[%s581 + $0x8] sm:$0xff]
        %v909 = vld [vmem:[%s581 + $0x18] sm:$0xff]
        %v910 = vld [vmem:[%s581 + $0x20] sm:$0xff]
        %v911 = vld [vmem:[%s581 + $0x30] sm:$0xff]
        %v912 = vld [vmem:[%s581 + $0x38] sm:$0xff]
        %v913 = vld [vmem:[%s581 + $0x48] sm:$0xff]
        %v914 = vld [vmem:[%s581 + $0x50] sm:$0xff]
        %v915 = vld [vmem:[%s581 + $0x60] sm:$0xff]
        %v916 = vld [vmem:[%s581 + $0x68] sm:$0xff]
        %v917 = vld [vmem:[%s581 + $0x78] sm:$0xff]
        %v918 = vld [vmem:[%s581 + $0x80] sm:$0xff]
        %v919 = vld [vmem:[%s581 + $0x90] sm:$0xff]
        %v920 = vld [vmem:[%s581 + $0x98] sm:$0xff]
        %v921 = vld [vmem:[%s581 + $0xa8] sm:$0xff]
        %v922 = vld [vmem:[%s581 + $0xb0] sm:$0xff]
        %v923 = vld [vmem:[%s581 + $0xc0] sm:$0xff]
        %v924 = vld [vmem:[%s581 + $0xc8] sm:$0xff]
        %v925 = vld [vmem:[%s581 + $0xd8] sm:$0xff]
        %v926 = vld [vmem:[%s581 + $0xe0] sm:$0xff]
        %v927 = vld [vmem:[%s581 + $0xf0] sm:$0xff]
        %v928 = vld [vmem:[%s581 + $0xf8] sm:$0xff]
        %v929 = vld [vmem:[%s581 + $0x108] sm:$0xff]
        %v930 = vld [vmem:[%s581 + $0x110] sm:$0xff]
        %v931 = vld [vmem:[%s581 + $0x120] sm:$0xff]
        %v932 = vld [vmem:[%s581 + $0x128] sm:$0xff]
        %v933 = vld [vmem:[%s581 + $0x138] sm:$0xff]
        %v934 = vld [vmem:[%s581 + $0x140] sm:$0xff]
        %v935 = vld [vmem:[%s581 + $0x150] sm:$0xff]
        %v936 = vld [vmem:[%s581 + $0x158] sm:$0xff]
        %v937 = vld [vmem:[%s581 + $0x168] sm:$0xff]
        %v938 = vld [vmem:[%s581 + $0x170] sm:$0xff]
        %v939 = vperm.slane %v614, 3
        %v940 = vmul.f32 %v907, %v939
        %v941 = vmul.f32 %v908, %v939
        %v942 = vmul.f32 %v909, %v939
        %v943 = vmul.f32 %v910, %v939
        %v944 = vmul.f32 %v911, %v939
        %v945 = vmul.f32 %v912, %v939
        %v946 = vmul.f32 %v913, %v939
        %v947 = vmul.f32 %v914, %v939
        %v948 = vmul.f32 %v915, %v939
        %v949 = vmul.f32 %v916, %v939
        %v950 = vmul.f32 %v917, %v939
        %v951 = vmul.f32 %v918, %v939
        %v952 = vmul.f32 %v919, %v939
        %v953 = vmul.f32 %v920, %v939
        %v954 = vmul.f32 %v921, %v939
        %v955 = vmul.f32 %v922, %v939
        %v956 = vmul.f32 %v923, %v939
        %v957 = vmul.f32 %v924, %v939
        %v958 = vmul.f32 %v925, %v939
        %v959 = vmul.f32 %v926, %v939
        %v960 = vmul.f32 %v927, %v939
        %v961 = vmul.f32 %v928, %v939
        %v962 = vmul.f32 %v929, %v939
        %v963 = vmul.f32 %v930, %v939
        %v964 = vmul.f32 %v931, %v939
        %v965 = vmul.f32 %v932, %v939
        %v966 = vmul.f32 %v933, %v939
        %v967 = vmul.f32 %v934, %v939
        %v968 = vmul.f32 %v935, %v939
        %v969 = vmul.f32 %v936, %v939
        %v970 = vmul.f32 %v937, %v939
        %v971 = vmul.f32 %v938, %v939
        %v972 = vadd.f32 %v875, %v940
        %v973 = vadd.f32 %v876, %v941
        %v974 = vadd.f32 %v877, %v942
        %v975 = vadd.f32 %v878, %v943
        %v976 = vadd.f32 %v879, %v944
        %v977 = vadd.f32 %v880, %v945
        %v978 = vadd.f32 %v881, %v946
        %v979 = vadd.f32 %v882, %v947
        %v980 = vadd.f32 %v883, %v948
        %v981 = vadd.f32 %v884, %v949
        %v982 = vadd.f32 %v885, %v950
        %v983 = vadd.f32 %v886, %v951
        %v984 = vadd.f32 %v887, %v952
        %v985 = vadd.f32 %v888, %v953
        %v986 = vadd.f32 %v889, %v954
        %v987 = vadd.f32 %v890, %v955
        %v988 = vadd.f32 %v891, %v956
        %v989 = vadd.f32 %v892, %v957
        %v990 = vadd.f32 %v893, %v958
        %v991 = vadd.f32 %v894, %v959
        %v992 = vadd.f32 %v895, %v960
        %v993 = vadd.f32 %v896, %v961
        %v994 = vadd.f32 %v897, %v962
        %v995 = vadd.f32 %v898, %v963
        %v996 = vadd.f32 %v899, %v964
        %v997 = vadd.f32 %v900, %v965
        %v998 = vadd.f32 %v901, %v966
        %v999 = vadd.f32 %v902, %v967
        %v1000 = vadd.f32 %v903, %v968
        %v1001 = vadd.f32 %v904, %v969
        %v1002 = vadd.f32 %v905, %v970
        %v1003 = vadd.f32 %v906, %v971
        %v1004 = vld [vmem:[%s581 + $0x1] sm:$0xff]
        %v1005 = vld [vmem:[%s581 + $0x9] sm:$0xff]
        %v1006 = vld [vmem:[%s581 + $0x19] sm:$0xff]
        %v1007 = vld [vmem:[%s581 + $0x21] sm:$0xff]
        %v1008 = vld [vmem:[%s581 + $0x31] sm:$0xff]
        %v1009 = vld [vmem:[%s581 + $0x39] sm:$0xff]
        %v1010 = vld [vmem:[%s581 + $0x49] sm:$0xff]
        %v1011 = vld [vmem:[%s581 + $0x51] sm:$0xff]
        %v1012 = vld [vmem:[%s581 + $0x61] sm:$0xff]
        %v1013 = vld [vmem:[%s581 + $0x69] sm:$0xff]
        %v1014 = vld [vmem:[%s581 + $0x79] sm:$0xff]
        %v1015 = vld [vmem:[%s581 + $0x81] sm:$0xff]
        %v1016 = vld [vmem:[%s581 + $0x91] sm:$0xff]
        %v1017 = vld [vmem:[%s581 + $0x99] sm:$0xff]
        %v1018 = vld [vmem:[%s581 + $0xa9] sm:$0xff]
        %v1019 = vld [vmem:[%s581 + $0xb1] sm:$0xff]
        %v1020 = vld [vmem:[%s581 + $0xc1] sm:$0xff]
        %v1021 = vld [vmem:[%s581 + $0xc9] sm:$0xff]
        %v1022 = vld [vmem:[%s581 + $0xd9] sm:$0xff]
        %v1023 = vld [vmem:[%s581 + $0xe1] sm:$0xff]
        %v1024 = vld [vmem:[%s581 + $0xf1] sm:$0xff]
        %v1025 = vld [vmem:[%s581 + $0xf9] sm:$0xff]
        %v1026 = vld [vmem:[%s581 + $0x109] sm:$0xff]
        %v1027 = vld [vmem:[%s581 + $0x111] sm:$0xff]
        %v1028 = vld [vmem:[%s581 + $0x121] sm:$0xff]
        %v1029 = vld [vmem:[%s581 + $0x129] sm:$0xff]
        %v1030 = vld [vmem:[%s581 + $0x139] sm:$0xff]
        %v1031 = vld [vmem:[%s581 + $0x141] sm:$0xff]
        %v1032 = vld [vmem:[%s581 + $0x151] sm:$0xff]
        %v1033 = vld [vmem:[%s581 + $0x159] sm:$0xff]
        %v1034 = vld [vmem:[%s581 + $0x169] sm:$0xff]
        %v1035 = vld [vmem:[%s581 + $0x171] sm:$0xff]
        %v1036 = vperm.slane %v614, 4
        %v1037 = vmul.f32 %v1004, %v1036
        %v1038 = vmul.f32 %v1005, %v1036
        %v1039 = vmul.f32 %v1006, %v1036
        %v1040 = vmul.f32 %v1007, %v1036
        %v1041 = vmul.f32 %v1008, %v1036
        %v1042 = vmul.f32 %v1009, %v1036
        %v1043 = vmul.f32 %v1010, %v1036
        %v1044 = vmul.f32 %v1011, %v1036
        %v1045 = vmul.f32 %v1012, %v1036
        %v1046 = vmul.f32 %v1013, %v1036
        %v1047 = vmul.f32 %v1014, %v1036
        %v1048 = vmul.f32 %v1015, %v1036
        %v1049 = vmul.f32 %v1016, %v1036
        %v1050 = vmul.f32 %v1017, %v1036
        %v1051 = vmul.f32 %v1018, %v1036
        %v1052 = vmul.f32 %v1019, %v1036
        %v1053 = vmul.f32 %v1020, %v1036
        %v1054 = vmul.f32 %v1021, %v1036
        %v1055 = vmul.f32 %v1022, %v1036
        %v1056 = vmul.f32 %v1023, %v1036
        %v1057 = vmul.f32 %v1024, %v1036
        %v1058 = vmul.f32 %v1025, %v1036
        %v1059 = vmul.f32 %v1026, %v1036
        %v1060 = vmul.f32 %v1027, %v1036
        %v1061 = vmul.f32 %v1028, %v1036
        %v1062 = vmul.f32 %v1029, %v1036
        %v1063 = vmul.f32 %v1030, %v1036
        %v1064 = vmul.f32 %v1031, %v1036
        %v1065 = vmul.f32 %v1032, %v1036
        %v1066 = vmul.f32 %v1033, %v1036
        %v1067 = vmul.f32 %v1034, %v1036
        %v1068 = vmul.f32 %v1035, %v1036
        %v1069 = vadd.f32 %v972, %v1037
        %v1070 = vadd.f32 %v973, %v1038
        %v1071 = vadd.f32 %v974, %v1039
        %v1072 = vadd.f32 %v975, %v1040
        %v1073 = vadd.f32 %v976, %v1041
        %v1074 = vadd.f32 %v977, %v1042
        %v1075 = vadd.f32 %v978, %v1043
        %v1076 = vadd.f32 %v979, %v1044
        %v1077 = vadd.f32 %v980, %v1045
        %v1078 = vadd.f32 %v981, %v1046
        %v1079 = vadd.f32 %v982, %v1047
        %v1080 = vadd.f32 %v983, %v1048
        %v1081 = vadd.f32 %v984, %v1049
        %v1082 = vadd.f32 %v985, %v1050
        %v1083 = vadd.f32 %v986, %v1051
        %v1084 = vadd.f32 %v987, %v1052
        %v1085 = vadd.f32 %v988, %v1053
        %v1086 = vadd.f32 %v989, %v1054
        %v1087 = vadd.f32 %v990, %v1055
        %v1088 = vadd.f32 %v991, %v1056
        %v1089 = vadd.f32 %v992, %v1057
        %v1090 = vadd.f32 %v993, %v1058
        %v1091 = vadd.f32 %v994, %v1059
        %v1092 = vadd.f32 %v995, %v1060
        %v1093 = vadd.f32 %v996, %v1061
        %v1094 = vadd.f32 %v997, %v1062
        %v1095 = vadd.f32 %v998, %v1063
        %v1096 = vadd.f32 %v999, %v1064
        %v1097 = vadd.f32 %v1000, %v1065
        %v1098 = vadd.f32 %v1001, %v1066
        %v1099 = vadd.f32 %v1002, %v1067
        %v1100 = vadd.f32 %v1003, %v1068
        %v1101 = vld [vmem:[%s581 + $0x2] sm:$0xff]
        %v1102 = vld [vmem:[%s581 + $0xa] sm:$0xff]
        %v1103 = vld [vmem:[%s581 + $0x1a] sm:$0xff]
        %v1104 = vld [vmem:[%s581 + $0x22] sm:$0xff]
        %v1105 = vld [vmem:[%s581 + $0x32] sm:$0xff]
        %v1106 = vld [vmem:[%s581 + $0x3a] sm:$0xff]
        %v1107 = vld [vmem:[%s581 + $0x4a] sm:$0xff]
        %v1108 = vld [vmem:[%s581 + $0x52] sm:$0xff]
        %v1109 = vld [vmem:[%s581 + $0x62] sm:$0xff]
        %v1110 = vld [vmem:[%s581 + $0x6a] sm:$0xff]
        %v1111 = vld [vmem:[%s581 + $0x7a] sm:$0xff]
        %v1112 = vld [vmem:[%s581 + $0x82] sm:$0xff]
        %v1113 = vld [vmem:[%s581 + $0x92] sm:$0xff]
        %v1114 = vld [vmem:[%s581 + $0x9a] sm:$0xff]
        %v1115 = vld [vmem:[%s581 + $0xaa] sm:$0xff]
        %v1116 = vld [vmem:[%s581 + $0xb2] sm:$0xff]
        %v1117 = vld [vmem:[%s581 + $0xc2] sm:$0xff]
        %v1118 = vld [vmem:[%s581 + $0xca] sm:$0xff]
        %v1119 = vld [vmem:[%s581 + $0xda] sm:$0xff]
        %v1120 = vld [vmem:[%s581 + $0xe2] sm:$0xff]
        %v1121 = vld [vmem:[%s581 + $0xf2] sm:$0xff]
        %v1122 = vld [vmem:[%s581 + $0xfa] sm:$0xff]
        %v1123 = vld [vmem:[%s581 + $0x10a] sm:$0xff]
        %v1124 = vld [vmem:[%s581 + $0x112] sm:$0xff]
        %v1125 = vld [vmem:[%s581 + $0x122] sm:$0xff]
        %v1126 = vld [vmem:[%s581 + $0x12a] sm:$0xff]
        %v1127 = vld [vmem:[%s581 + $0x13a] sm:$0xff]
        %v1128 = vld [vmem:[%s581 + $0x142] sm:$0xff]
        %v1129 = vld [vmem:[%s581 + $0x152] sm:$0xff]
        %v1130 = vld [vmem:[%s581 + $0x15a] sm:$0xff]
        %v1131 = vld [vmem:[%s581 + $0x16a] sm:$0xff]
        %v1132 = vld [vmem:[%s581 + $0x172] sm:$0xff]
        %v1133 = vperm.slane %v614, 5
        %v1134 = vmul.f32 %v1101, %v1133
        %v1135 = vmul.f32 %v1102, %v1133
        %v1136 = vmul.f32 %v1103, %v1133
        %v1137 = vmul.f32 %v1104, %v1133
        %v1138 = vmul.f32 %v1105, %v1133
        %v1139 = vmul.f32 %v1106, %v1133
        %v1140 = vmul.f32 %v1107, %v1133
        %v1141 = vmul.f32 %v1108, %v1133
        %v1142 = vmul.f32 %v1109, %v1133
        %v1143 = vmul.f32 %v1110, %v1133
        %v1144 = vmul.f32 %v1111, %v1133
        %v1145 = vmul.f32 %v1112, %v1133
        %v1146 = vmul.f32 %v1113, %v1133
        %v1147 = vmul.f32 %v1114, %v1133
        %v1148 = vmul.f32 %v1115, %v1133
        %v1149 = vmul.f32 %v1116, %v1133
        %v1150 = vmul.f32 %v1117, %v1133
        %v1151 = vmul.f32 %v1118, %v1133
        %v1152 = vmul.f32 %v1119, %v1133
        %v1153 = vmul.f32 %v1120, %v1133
        %v1154 = vmul.f32 %v1121, %v1133
        %v1155 = vmul.f32 %v1122, %v1133
        %v1156 = vmul.f32 %v1123, %v1133
        %v1157 = vmul.f32 %v1124, %v1133
        %v1158 = vmul.f32 %v1125, %v1133
        %v1159 = vmul.f32 %v1126, %v1133
        %v1160 = vmul.f32 %v1127, %v1133
        %v1161 = vmul.f32 %v1128, %v1133
        %v1162 = vmul.f32 %v1129, %v1133
        %v1163 = vmul.f32 %v1130, %v1133
        %v1164 = vmul.f32 %v1131, %v1133
        %v1165 = vmul.f32 %v1132, %v1133
        %v1166 = vadd.f32 %v1069, %v1134
        %v1167 = vadd.f32 %v1070, %v1135
        %v1168 = vadd.f32 %v1071, %v1136
        %v1169 = vadd.f32 %v1072, %v1137
        %v1170 = vadd.f32 %v1073, %v1138
        %v1171 = vadd.f32 %v1074, %v1139
        %v1172 = vadd.f32 %v1075, %v1140
        %v1173 = vadd.f32 %v1076, %v1141
        %v1174 = vadd.f32 %v1077, %v1142
        %v1175 = vadd.f32 %v1078, %v1143
        %v1176 = vadd.f32 %v1079, %v1144
        %v1177 = vadd.f32 %v1080, %v1145
        %v1178 = vadd.f32 %v1081, %v1146
        %v1179 = vadd.f32 %v1082, %v1147
        %v1180 = vadd.f32 %v1083, %v1148
        %v1181 = vadd.f32 %v1084, %v1149
        %v1182 = vadd.f32 %v1085, %v1150
        %v1183 = vadd.f32 %v1086, %v1151
        %v1184 = vadd.f32 %v1087, %v1152
        %v1185 = vadd.f32 %v1088, %v1153
        %v1186 = vadd.f32 %v1089, %v1154
        %v1187 = vadd.f32 %v1090, %v1155
        %v1188 = vadd.f32 %v1091, %v1156
        %v1189 = vadd.f32 %v1092, %v1157
        %v1190 = vadd.f32 %v1093, %v1158
        %v1191 = vadd.f32 %v1094, %v1159
        %v1192 = vadd.f32 %v1095, %v1160
        %v1193 = vadd.f32 %v1096, %v1161
        %v1194 = vadd.f32 %v1097, %v1162
        %v1195 = vadd.f32 %v1098, %v1163
        %v1196 = vadd.f32 %v1099, %v1164
        %v1197 = vadd.f32 %v1100, %v1165
        %s1198 = scalar_lea.vmem [#allocation2], 48
        %v1199 = vld [vmem:[%s1198] sm:$0xff]
        %v1200 = vld [vmem:[%s1198 + $0x8] sm:$0xff]
        %v1201 = vld [vmem:[%s1198 + $0x18] sm:$0xff]
        %v1202 = vld [vmem:[%s1198 + $0x20] sm:$0xff]
        %v1203 = vld [vmem:[%s1198 + $0x30] sm:$0xff]
        %v1204 = vld [vmem:[%s1198 + $0x38] sm:$0xff]
        %v1205 = vld [vmem:[%s1198 + $0x48] sm:$0xff]
        %v1206 = vld [vmem:[%s1198 + $0x50] sm:$0xff]
        %v1207 = vld [vmem:[%s1198 + $0x60] sm:$0xff]
        %v1208 = vld [vmem:[%s1198 + $0x68] sm:$0xff]
        %v1209 = vld [vmem:[%s1198 + $0x78] sm:$0xff]
        %v1210 = vld [vmem:[%s1198 + $0x80] sm:$0xff]
        %v1211 = vld [vmem:[%s1198 + $0x90] sm:$0xff]
        %v1212 = vld [vmem:[%s1198 + $0x98] sm:$0xff]
        %v1213 = vld [vmem:[%s1198 + $0xa8] sm:$0xff]
        %v1214 = vld [vmem:[%s1198 + $0xb0] sm:$0xff]
        %v1215 = vld [vmem:[%s1198 + $0xc0] sm:$0xff]
        %v1216 = vld [vmem:[%s1198 + $0xc8] sm:$0xff]
        %v1217 = vld [vmem:[%s1198 + $0xd8] sm:$0xff]
        %v1218 = vld [vmem:[%s1198 + $0xe0] sm:$0xff]
        %v1219 = vld [vmem:[%s1198 + $0xf0] sm:$0xff]
        %v1220 = vld [vmem:[%s1198 + $0xf8] sm:$0xff]
        %v1221 = vld [vmem:[%s1198 + $0x108] sm:$0xff]
        %v1222 = vld [vmem:[%s1198 + $0x110] sm:$0xff]
        %v1223 = vld [vmem:[%s1198 + $0x120] sm:$0xff]
        %v1224 = vld [vmem:[%s1198 + $0x128] sm:$0xff]
        %v1225 = vld [vmem:[%s1198 + $0x138] sm:$0xff]
        %v1226 = vld [vmem:[%s1198 + $0x140] sm:$0xff]
        %v1227 = vld [vmem:[%s1198 + $0x150] sm:$0xff]
        %v1228 = vld [vmem:[%s1198 + $0x158] sm:$0xff]
        %v1229 = vld [vmem:[%s1198 + $0x168] sm:$0xff]
        %v1230 = vld [vmem:[%s1198 + $0x170] sm:$0xff]
        %v1231 = vperm.slane %v614, 6
        %v1232 = vmul.f32 %v1199, %v1231
        %v1233 = vmul.f32 %v1200, %v1231
        %v1234 = vmul.f32 %v1201, %v1231
        %v1235 = vmul.f32 %v1202, %v1231
        %v1236 = vmul.f32 %v1203, %v1231
        %v1237 = vmul.f32 %v1204, %v1231
        %v1238 = vmul.f32 %v1205, %v1231
        %v1239 = vmul.f32 %v1206, %v1231
        %v1240 = vmul.f32 %v1207, %v1231
        %v1241 = vmul.f32 %v1208, %v1231
        %v1242 = vmul.f32 %v1209, %v1231
        %v1243 = vmul.f32 %v1210, %v1231
        %v1244 = vmul.f32 %v1211, %v1231
        %v1245 = vmul.f32 %v1212, %v1231
        %v1246 = vmul.f32 %v1213, %v1231
        %v1247 = vmul.f32 %v1214, %v1231
        %v1248 = vmul.f32 %v1215, %v1231
        %v1249 = vmul.f32 %v1216, %v1231
        %v1250 = vmul.f32 %v1217, %v1231
        %v1251 = vmul.f32 %v1218, %v1231
        %v1252 = vmul.f32 %v1219, %v1231
        %v1253 = vmul.f32 %v1220, %v1231
        %v1254 = vmul.f32 %v1221, %v1231
        %v1255 = vmul.f32 %v1222, %v1231
        %v1256 = vmul.f32 %v1223, %v1231
        %v1257 = vmul.f32 %v1224, %v1231
        %v1258 = vmul.f32 %v1225, %v1231
        %v1259 = vmul.f32 %v1226, %v1231
        %v1260 = vmul.f32 %v1227, %v1231
        %v1261 = vmul.f32 %v1228, %v1231
        %v1262 = vmul.f32 %v1229, %v1231
        %v1263 = vmul.f32 %v1230, %v1231
        %v1264 = vadd.f32 %v1166, %v1232
        %v1265 = vadd.f32 %v1167, %v1233
        %v1266 = vadd.f32 %v1168, %v1234
        %v1267 = vadd.f32 %v1169, %v1235
        %v1268 = vadd.f32 %v1170, %v1236
        %v1269 = vadd.f32 %v1171, %v1237
        %v1270 = vadd.f32 %v1172, %v1238
        %v1271 = vadd.f32 %v1173, %v1239
        %v1272 = vadd.f32 %v1174, %v1240
        %v1273 = vadd.f32 %v1175, %v1241
        %v1274 = vadd.f32 %v1176, %v1242
        %v1275 = vadd.f32 %v1177, %v1243
        %v1276 = vadd.f32 %v1178, %v1244
        %v1277 = vadd.f32 %v1179, %v1245
        %v1278 = vadd.f32 %v1180, %v1246
        %v1279 = vadd.f32 %v1181, %v1247
        %v1280 = vadd.f32 %v1182, %v1248
        %v1281 = vadd.f32 %v1183, %v1249
        %v1282 = vadd.f32 %v1184, %v1250
        %v1283 = vadd.f32 %v1185, %v1251
        %v1284 = vadd.f32 %v1186, %v1252
        %v1285 = vadd.f32 %v1187, %v1253
        %v1286 = vadd.f32 %v1188, %v1254
        %v1287 = vadd.f32 %v1189, %v1255
        %v1288 = vadd.f32 %v1190, %v1256
        %v1289 = vadd.f32 %v1191, %v1257
        %v1290 = vadd.f32 %v1192, %v1258
        %v1291 = vadd.f32 %v1193, %v1259
        %v1292 = vadd.f32 %v1194, %v1260
        %v1293 = vadd.f32 %v1195, %v1261
        %v1294 = vadd.f32 %v1196, %v1262
        %v1295 = vadd.f32 %v1197, %v1263
        %v1296 = vld [vmem:[%s1198 + $0x1] sm:$0xff]
        %v1297 = vld [vmem:[%s1198 + $0x9] sm:$0xff]
        %v1298 = vld [vmem:[%s1198 + $0x19] sm:$0xff]
        %v1299 = vld [vmem:[%s1198 + $0x21] sm:$0xff]
        %v1300 = vld [vmem:[%s1198 + $0x31] sm:$0xff]
        %v1301 = vld [vmem:[%s1198 + $0x39] sm:$0xff]
        %v1302 = vld [vmem:[%s1198 + $0x49] sm:$0xff]
        %v1303 = vld [vmem:[%s1198 + $0x51] sm:$0xff]
        %v1304 = vld [vmem:[%s1198 + $0x61] sm:$0xff]
        %v1305 = vld [vmem:[%s1198 + $0x69] sm:$0xff]
        %v1306 = vld [vmem:[%s1198 + $0x79] sm:$0xff]
        %v1307 = vld [vmem:[%s1198 + $0x81] sm:$0xff]
        %v1308 = vld [vmem:[%s1198 + $0x91] sm:$0xff]
        %v1309 = vld [vmem:[%s1198 + $0x99] sm:$0xff]
        %v1310 = vld [vmem:[%s1198 + $0xa9] sm:$0xff]
        %v1311 = vld [vmem:[%s1198 + $0xb1] sm:$0xff]
        %v1312 = vld [vmem:[%s1198 + $0xc1] sm:$0xff]
        %v1313 = vld [vmem:[%s1198 + $0xc9] sm:$0xff]
        %v1314 = vld [vmem:[%s1198 + $0xd9] sm:$0xff]
        %v1315 = vld [vmem:[%s1198 + $0xe1] sm:$0xff]
        %v1316 = vld [vmem:[%s1198 + $0xf1] sm:$0xff]
        %v1317 = vld [vmem:[%s1198 + $0xf9] sm:$0xff]
        %v1318 = vld [vmem:[%s1198 + $0x109] sm:$0xff]
        %v1319 = vld [vmem:[%s1198 + $0x111] sm:$0xff]
        %v1320 = vld [vmem:[%s1198 + $0x121] sm:$0xff]
        %v1321 = vld [vmem:[%s1198 + $0x129] sm:$0xff]
        %v1322 = vld [vmem:[%s1198 + $0x139] sm:$0xff]
        %v1323 = vld [vmem:[%s1198 + $0x141] sm:$0xff]
        %v1324 = vld [vmem:[%s1198 + $0x151] sm:$0xff]
        %v1325 = vld [vmem:[%s1198 + $0x159] sm:$0xff]
        %v1326 = vld [vmem:[%s1198 + $0x169] sm:$0xff]
        %v1327 = vld [vmem:[%s1198 + $0x171] sm:$0xff]
        %v1328 = vperm.slane %v614, 7
        %v1329 = vmul.f32 %v1296, %v1328
        %v1330 = vmul.f32 %v1297, %v1328
        %v1331 = vmul.f32 %v1298, %v1328
        %v1332 = vmul.f32 %v1299, %v1328
        %v1333 = vmul.f32 %v1300, %v1328
        %v1334 = vmul.f32 %v1301, %v1328
        %v1335 = vmul.f32 %v1302, %v1328
        %v1336 = vmul.f32 %v1303, %v1328
        %v1337 = vmul.f32 %v1304, %v1328
        %v1338 = vmul.f32 %v1305, %v1328
        %v1339 = vmul.f32 %v1306, %v1328
        %v1340 = vmul.f32 %v1307, %v1328
        %v1341 = vmul.f32 %v1308, %v1328
        %v1342 = vmul.f32 %v1309, %v1328
        %v1343 = vmul.f32 %v1310, %v1328
        %v1344 = vmul.f32 %v1311, %v1328
        %v1345 = vmul.f32 %v1312, %v1328
        %v1346 = vmul.f32 %v1313, %v1328
        %v1347 = vmul.f32 %v1314, %v1328
        %v1348 = vmul.f32 %v1315, %v1328
        %v1349 = vmul.f32 %v1316, %v1328
        %v1350 = vmul.f32 %v1317, %v1328
        %v1351 = vmul.f32 %v1318, %v1328
        %v1352 = vmul.f32 %v1319, %v1328
        %v1353 = vmul.f32 %v1320, %v1328
        %v1354 = vmul.f32 %v1321, %v1328
        %v1355 = vmul.f32 %v1322, %v1328
        %v1356 = vmul.f32 %v1323, %v1328
        %v1357 = vmul.f32 %v1324, %v1328
        %v1358 = vmul.f32 %v1325, %v1328
        %v1359 = vmul.f32 %v1326, %v1328
        %v1360 = vmul.f32 %v1327, %v1328
        %v1361 = vadd.f32 %v1264, %v1329
        %v1362 = vadd.f32 %v1265, %v1330
        %v1363 = vadd.f32 %v1266, %v1331
        %v1364 = vadd.f32 %v1267, %v1332
        %v1365 = vadd.f32 %v1268, %v1333
        %v1366 = vadd.f32 %v1269, %v1334
        %v1367 = vadd.f32 %v1270, %v1335
        %v1368 = vadd.f32 %v1271, %v1336
        %v1369 = vadd.f32 %v1272, %v1337
        %v1370 = vadd.f32 %v1273, %v1338
        %v1371 = vadd.f32 %v1274, %v1339
        %v1372 = vadd.f32 %v1275, %v1340
        %v1373 = vadd.f32 %v1276, %v1341
        %v1374 = vadd.f32 %v1277, %v1342
        %v1375 = vadd.f32 %v1278, %v1343
        %v1376 = vadd.f32 %v1279, %v1344
        %v1377 = vadd.f32 %v1280, %v1345
        %v1378 = vadd.f32 %v1281, %v1346
        %v1379 = vadd.f32 %v1282, %v1347
        %v1380 = vadd.f32 %v1283, %v1348
        %v1381 = vadd.f32 %v1284, %v1349
        %v1382 = vadd.f32 %v1285, %v1350
        %v1383 = vadd.f32 %v1286, %v1351
        %v1384 = vadd.f32 %v1287, %v1352
        %v1385 = vadd.f32 %v1288, %v1353
        %v1386 = vadd.f32 %v1289, %v1354
        %v1387 = vadd.f32 %v1290, %v1355
        %v1388 = vadd.f32 %v1291, %v1356
        %v1389 = vadd.f32 %v1292, %v1357
        %v1390 = vadd.f32 %v1293, %v1358
        %v1391 = vadd.f32 %v1294, %v1359
        %v1392 = vadd.f32 %v1295, %v1360
        %v1393 = vld [vmem:[%s1198 + $0x2] sm:$0xff]
        %v1394 = vld [vmem:[%s1198 + $0xa] sm:$0xff]
        %v1395 = vld [vmem:[%s1198 + $0x1a] sm:$0xff]
        %v1396 = vld [vmem:[%s1198 + $0x22] sm:$0xff]
        %v1397 = vld [vmem:[%s1198 + $0x32] sm:$0xff]
        %v1398 = vld [vmem:[%s1198 + $0x3a] sm:$0xff]
        %v1399 = vld [vmem:[%s1198 + $0x4a] sm:$0xff]
        %v1400 = vld [vmem:[%s1198 + $0x52] sm:$0xff]
        %v1401 = vld [vmem:[%s1198 + $0x62] sm:$0xff]
        %v1402 = vld [vmem:[%s1198 + $0x6a] sm:$0xff]
        %v1403 = vld [vmem:[%s1198 + $0x7a] sm:$0xff]
        %v1404 = vld [vmem:[%s1198 + $0x82] sm:$0xff]
        %v1405 = vld [vmem:[%s1198 + $0x92] sm:$0xff]
        %v1406 = vld [vmem:[%s1198 + $0x9a] sm:$0xff]
        %v1407 = vld [vmem:[%s1198 + $0xaa] sm:$0xff]
        %v1408 = vld [vmem:[%s1198 + $0xb2] sm:$0xff]
        %v1409 = vld [vmem:[%s1198 + $0xc2] sm:$0xff]
        %v1410 = vld [vmem:[%s1198 + $0xca] sm:$0xff]
        %v1411 = vld [vmem:[%s1198 + $0xda] sm:$0xff]
        %v1412 = vld [vmem:[%s1198 + $0xe2] sm:$0xff]
        %v1413 = vld [vmem:[%s1198 + $0xf2] sm:$0xff]
        %v1414 = vld [vmem:[%s1198 + $0xfa] sm:$0xff]
        %v1415 = vld [vmem:[%s1198 + $0x10a] sm:$0xff]
        %v1416 = vld [vmem:[%s1198 + $0x112] sm:$0xff]
        %v1417 = vld [vmem:[%s1198 + $0x122] sm:$0xff]
        %v1418 = vld [vmem:[%s1198 + $0x12a] sm:$0xff]
        %v1419 = vld [vmem:[%s1198 + $0x13a] sm:$0xff]
        %v1420 = vld [vmem:[%s1198 + $0x142] sm:$0xff]
        %v1421 = vld [vmem:[%s1198 + $0x152] sm:$0xff]
        %v1422 = vld [vmem:[%s1198 + $0x15a] sm:$0xff]
        %v1423 = vld [vmem:[%s1198 + $0x16a] sm:$0xff]
        %v1424 = vld [vmem:[%s1198 + $0x172] sm:$0xff]
        %v1425 = vperm.slane %v615, 0
        %v1426 = vmul.f32 %v1393, %v1425
        %v1427 = vmul.f32 %v1394, %v1425
        %v1428 = vmul.f32 %v1395, %v1425
        %v1429 = vmul.f32 %v1396, %v1425
        %v1430 = vmul.f32 %v1397, %v1425
        %v1431 = vmul.f32 %v1398, %v1425
        %v1432 = vmul.f32 %v1399, %v1425
        %v1433 = vmul.f32 %v1400, %v1425
        %v1434 = vmul.f32 %v1401, %v1425
        %v1435 = vmul.f32 %v1402, %v1425
        %v1436 = vmul.f32 %v1403, %v1425
        %v1437 = vmul.f32 %v1404, %v1425
        %v1438 = vmul.f32 %v1405, %v1425
        %v1439 = vmul.f32 %v1406, %v1425
        %v1440 = vmul.f32 %v1407, %v1425
        %v1441 = vmul.f32 %v1408, %v1425
        %v1442 = vmul.f32 %v1409, %v1425
        %v1443 = vmul.f32 %v1410, %v1425
        %v1444 = vmul.f32 %v1411, %v1425
        %v1445 = vmul.f32 %v1412, %v1425
        %v1446 = vmul.f32 %v1413, %v1425
        %v1447 = vmul.f32 %v1414, %v1425
        %v1448 = vmul.f32 %v1415, %v1425
        %v1449 = vmul.f32 %v1416, %v1425
        %v1450 = vmul.f32 %v1417, %v1425
        %v1451 = vmul.f32 %v1418, %v1425
        %v1452 = vmul.f32 %v1419, %v1425
        %v1453 = vmul.f32 %v1420, %v1425
        %v1454 = vmul.f32 %v1421, %v1425
        %v1455 = vmul.f32 %v1422, %v1425
        %v1456 = vmul.f32 %v1423, %v1425
        %v1457 = vmul.f32 %v1424, %v1425
        %v1458 = vadd.f32 %v1361, %v1426
        %v1459 = vadd.f32 %v1362, %v1427
        %v1460 = vadd.f32 %v1363, %v1428
        %v1461 = vadd.f32 %v1364, %v1429
        %v1462 = vadd.f32 %v1365, %v1430
        %v1463 = vadd.f32 %v1366, %v1431
        %v1464 = vadd.f32 %v1367, %v1432
        %v1465 = vadd.f32 %v1368, %v1433
        %v1466 = vadd.f32 %v1369, %v1434
        %v1467 = vadd.f32 %v1370, %v1435
        %v1468 = vadd.f32 %v1371, %v1436
        %v1469 = vadd.f32 %v1372, %v1437
        %v1470 = vadd.f32 %v1373, %v1438
        %v1471 = vadd.f32 %v1374, %v1439
        %v1472 = vadd.f32 %v1375, %v1440
        %v1473 = vadd.f32 %v1376, %v1441
        %v1474 = vadd.f32 %v1377, %v1442
        %v1475 = vadd.f32 %v1378, %v1443
        %v1476 = vadd.f32 %v1379, %v1444
        %v1477 = vadd.f32 %v1380, %v1445
        %v1478 = vadd.f32 %v1381, %v1446
        %v1479 = vadd.f32 %v1382, %v1447
        %v1480 = vadd.f32 %v1383, %v1448
        %v1481 = vadd.f32 %v1384, %v1449
        %v1482 = vadd.f32 %v1385, %v1450
        %v1483 = vadd.f32 %v1386, %v1451
        %v1484 = vadd.f32 %v1387, %v1452
        %v1485 = vadd.f32 %v1388, %v1453
        %v1486 = vadd.f32 %v1389, %v1454
        %v1487 = vadd.f32 %v1390, %v1455
        %v1488 = vadd.f32 %v1391, %v1456
        %v1489 = vadd.f32 %v1392, %v1457
        %v1490 = vld [vmem:[%s4] sm:$0x1]
        %v1492 = vperm.slane %v1490, 0
        %v1494 = vadd.f32 %v1458, %v1492
        %v1495 = vadd.f32 %v1459, %v1492
        %v1496 = vadd.f32 %v1460, %v1492
        %v1497 = vadd.f32 %v1461, %v1492
        %v1498 = vadd.f32 %v1462, %v1492
        %v1499 = vadd.f32 %v1463, %v1492
        %v1500 = vadd.f32 %v1464, %v1492
        %v1501 = vadd.f32 %v1465, %v1492
        %v1502 = vadd.f32 %v1466, %v1492
        %v1503 = vadd.f32 %v1467, %v1492
        %v1504 = vadd.f32 %v1468, %v1492
        %v1505 = vadd.f32 %v1469, %v1492
        %v1506 = vadd.f32 %v1470, %v1492
        %v1507 = vadd.f32 %v1471, %v1492
        %v1508 = vadd.f32 %v1472, %v1492
        %v1509 = vadd.f32 %v1473, %v1492
        %v1510 = vadd.f32 %v1474, %v1492
        %v1511 = vadd.f32 %v1475, %v1492
        %v1512 = vadd.f32 %v1476, %v1492
        %v1513 = vadd.f32 %v1477, %v1492
        %v1514 = vadd.f32 %v1478, %v1492
        %v1515 = vadd.f32 %v1479, %v1492
        %v1516 = vadd.f32 %v1480, %v1492
        %v1517 = vadd.f32 %v1481, %v1492
        %v1518 = vadd.f32 %v1482, %v1492
        %v1519 = vadd.f32 %v1483, %v1492
        %v1520 = vadd.f32 %v1484, %v1492
        %v1521 = vadd.f32 %v1485, %v1492
        %v1522 = vadd.f32 %v1486, %v1492
        %v1523 = vadd.f32 %v1487, %v1492
        %v1524 = vadd.f32 %v1488, %v1492
        %v1525 = vadd.f32 %v1489, %v1492
        %1558 = vrot.lane.b32.xlu0 %v1494, 64
        %v1559 = vpop.permute.xlu0 %1558
        %1560 = vrot.lane.b32.xlu0 %v1495, 64
        %v1561 = vpop.permute.xlu0 %1560
        %1562 = vrot.lane.b32.xlu0 %v1496, 64
        %v1563 = vpop.permute.xlu0 %1562
        %1564 = vrot.lane.b32.xlu0 %v1497, 64
        %v1565 = vpop.permute.xlu0 %1564
        %1566 = vrot.lane.b32.xlu0 %v1498, 64
        %v1567 = vpop.permute.xlu0 %1566
        %1568 = vrot.lane.b32.xlu0 %v1499, 64
        %v1569 = vpop.permute.xlu0 %1568
        %1570 = vrot.lane.b32.xlu0 %v1500, 64
        %v1571 = vpop.permute.xlu0 %1570
        %1572 = vrot.lane.b32.xlu0 %v1501, 64
        %v1573 = vpop.permute.xlu0 %1572
        %1574 = vrot.lane.b32.xlu0 %v1502, 64
        %v1575 = vpop.permute.xlu0 %1574
        %1576 = vrot.lane.b32.xlu0 %v1503, 64
        %v1577 = vpop.permute.xlu0 %1576
        %1578 = vrot.lane.b32.xlu0 %v1504, 64
        %v1579 = vpop.permute.xlu0 %1578
        %1580 = vrot.lane.b32.xlu0 %v1505, 64
        %v1581 = vpop.permute.xlu0 %1580
        %1582 = vrot.lane.b32.xlu0 %v1506, 64
        %v1583 = vpop.permute.xlu0 %1582
        %1584 = vrot.lane.b32.xlu0 %v1507, 64
        %v1585 = vpop.permute.xlu0 %1584
        %1586 = vrot.lane.b32.xlu0 %v1508, 64
        %v1587 = vpop.permute.xlu0 %1586
        %1588 = vrot.lane.b32.xlu0 %v1509, 64
        %v1589 = vpop.permute.xlu0 %1588
        %1590 = vrot.lane.b32.xlu0 %v1510, 64
        %v1591 = vpop.permute.xlu0 %1590
        %1592 = vrot.lane.b32.xlu0 %v1511, 64
        %v1593 = vpop.permute.xlu0 %1592
        %1594 = vrot.lane.b32.xlu0 %v1512, 64
        %v1595 = vpop.permute.xlu0 %1594
        %1596 = vrot.lane.b32.xlu0 %v1513, 64
        %v1597 = vpop.permute.xlu0 %1596
        %1598 = vrot.lane.b32.xlu0 %v1514, 64
        %v1599 = vpop.permute.xlu0 %1598
        %1600 = vrot.lane.b32.xlu0 %v1515, 64
        %v1601 = vpop.permute.xlu0 %1600
        %1602 = vrot.lane.b32.xlu0 %v1516, 64
        %v1603 = vpop.permute.xlu0 %1602
        %1604 = vrot.lane.b32.xlu0 %v1517, 64
        %v1605 = vpop.permute.xlu0 %1604
        %1606 = vrot.lane.b32.xlu0 %v1518, 64
        %v1607 = vpop.permute.xlu0 %1606
        %1608 = vrot.lane.b32.xlu0 %v1519, 64
        %v1609 = vpop.permute.xlu0 %1608
        %1610 = vrot.lane.b32.xlu0 %v1520, 64
        %v1611 = vpop.permute.xlu0 %1610
        %1612 = vrot.lane.b32.xlu0 %v1521, 64
        %v1613 = vpop.permute.xlu0 %1612
        %1614 = vrot.lane.b32.xlu0 %v1522, 64
        %v1615 = vpop.permute.xlu0 %1614
        %1616 = vrot.lane.b32.xlu0 %v1523, 64
        %v1617 = vpop.permute.xlu0 %1616
        %1618 = vrot.lane.b32.xlu0 %v1524, 64
        %v1619 = vpop.permute.xlu0 %1618
        %1620 = vrot.lane.b32.xlu0 %v1525, 64
        %v1621 = vpop.permute.xlu0 %1620
        %v1654 = vmul.f32 %v1494, %v1559
        %v1655 = vmul.f32 %v1495, %v1561
        %v1656 = vmul.f32 %v1496, %v1563
        %v1657 = vmul.f32 %v1497, %v1565
        %v1658 = vmul.f32 %v1498, %v1567
        %v1659 = vmul.f32 %v1499, %v1569
        %v1660 = vmul.f32 %v1500, %v1571
        %v1661 = vmul.f32 %v1501, %v1573
        %v1662 = vmul.f32 %v1502, %v1575
        %v1663 = vmul.f32 %v1503, %v1577
        %v1664 = vmul.f32 %v1504, %v1579
        %v1665 = vmul.f32 %v1505, %v1581
        %v1666 = vmul.f32 %v1506, %v1583
        %v1667 = vmul.f32 %v1507, %v1585
        %v1668 = vmul.f32 %v1508, %v1587
        %v1669 = vmul.f32 %v1509, %v1589
        %v1670 = vmul.f32 %v1510, %v1591
        %v1671 = vmul.f32 %v1511, %v1593
        %v1672 = vmul.f32 %v1512, %v1595
        %v1673 = vmul.f32 %v1513, %v1597
        %v1674 = vmul.f32 %v1514, %v1599
        %v1675 = vmul.f32 %v1515, %v1601
        %v1676 = vmul.f32 %v1516, %v1603
        %v1677 = vmul.f32 %v1517, %v1605
        %v1678 = vmul.f32 %v1518, %v1607
        %v1679 = vmul.f32 %v1519, %v1609
        %v1680 = vmul.f32 %v1520, %v1611
        %v1681 = vmul.f32 %v1521, %v1613
        %v1682 = vmul.f32 %v1522, %v1615
        %v1683 = vmul.f32 %v1523, %v1617
        %v1684 = vmul.f32 %v1524, %v1619
        %v1685 = vmul.f32 %v1525, %v1621
        %v1686 = vld [vmem:[%s5] sm:$0xff]
        %v1687 = vld [vmem:[%s5 + $0x8] sm:$0xff]
        %v1688 = vld [vmem:[%s5 + $0x10] sm:$0xff]
        %v1689 = vld [vmem:[%s5 + $0x18] sm:$0xff]
        %v1690 = vld [vmem:[%s5 + $0x20] sm:$0xff]
        %v1691 = vld [vmem:[%s5 + $0x28] sm:$0xff]
        %v1692 = vld [vmem:[%s5 + $0x30] sm:$0xff]
        %v1693 = vld [vmem:[%s5 + $0x38] sm:$0xff]
        %v1694 = vld [vmem:[%s6] sm:$0x1]
        %v1696 = vperm.slane %v1694, 0
        %vm1698 = vcmask 523264
        %v1700 = vsel %vm1698, %v1654, 0
        %v1703 = vsel %vm1698, %v1655, 0
        %v1706 = vsel %vm1698, %v1656, 0
        %v1709 = vsel %vm1698, %v1657, 0
        %v1712 = vsel %vm1698, %v1658, 0
        %v1715 = vsel %vm1698, %v1659, 0
        %v1718 = vsel %vm1698, %v1660, 0
        %v1721 = vsel %vm1698, %v1661, 0
        %v1724 = vsel %vm1698, %v1662, 0
        %v1727 = vsel %vm1698, %v1663, 0
        %v1730 = vsel %vm1698, %v1664, 0
        %v1733 = vsel %vm1698, %v1665, 0
        %v1736 = vsel %vm1698, %v1666, 0
        %v1739 = vsel %vm1698, %v1667, 0
        %v1742 = vsel %vm1698, %v1668, 0
        %v1745 = vsel %vm1698, %v1669, 0
        %v1748 = vsel %vm1698, %v1670, 0
        %v1751 = vsel %vm1698, %v1671, 0
        %v1754 = vsel %vm1698, %v1672, 0
        %v1757 = vsel %vm1698, %v1673, 0
        %v1760 = vsel %vm1698, %v1674, 0
        %v1763 = vsel %vm1698, %v1675, 0
        %v1766 = vsel %vm1698, %v1676, 0
        %v1769 = vsel %vm1698, %v1677, 0
        %v1772 = vsel %vm1698, %v1678, 0
        %v1775 = vsel %vm1698, %v1679, 0
        %v1778 = vsel %vm1698, %v1680, 0
        %v1781 = vsel %vm1698, %v1681, 0
        %v1784 = vsel %vm1698, %v1682, 0
        %v1787 = vsel %vm1698, %v1683, 0
        %v1790 = vsel %vm1698, %v1684, 0
        %v1793 = vsel %vm1698, %v1685, 0
        %1795 = vmatpush.msra.mxu0 0.0
        %1796 = vmatpush.msra.mxu0 0.0
        %1797 = vmatpush.msra.mxu0 0.0
        %1798 = vmatpush.msra.mxu0 0.0
        %1799 = vmatpush.msra.mxu0 0.0
        %1800 = vmatpush.msra.mxu0 0.0
        %1801 = vmatpush.msra.mxu0 0.0
        %1802 = vmatpush.msra.mxu0 0.0
        %1803 = vmatpush.msra.mxu0 %v1693
        %1804 = vmatpush.msra.mxu0 %v1692
        %1805 = vmatpush.msra.mxu0 %v1691
        %1806 = vmatpush.msra.mxu0 %v1690
        %1807 = vmatpush.msra.mxu0 %v1689
        %1808 = vmatpush.msra.mxu0 %v1688
        %1809 = vmatpush.msra.mxu0 %v1687
        %1810 = vmatpush.msra.mxu0 %v1686
        %1811 = vmatmul.f32.gmra.mxu0 %v1700
        %v1812 = vpop.f32.mrf.mxu0
        %v1813 = vadd.f32 %v1696, %v1812
        %1814 = vmatmul.f32.gmra.mxu0 %v1703
        %v1815 = vpop.f32.mrf.mxu0
        %v1816 = vadd.f32 %v1696, %v1815
        %1817 = vmatmul.f32.gmra.mxu0 %v1706
        %v1818 = vpop.f32.mrf.mxu0
        %v1819 = vadd.f32 %v1696, %v1818
        %1820 = vmatmul.f32.gmra.mxu0 %v1709
        %v1821 = vpop.f32.mrf.mxu0
        %v1822 = vadd.f32 %v1696, %v1821
        %1823 = vmatmul.f32.gmra.mxu0 %v1712
        %v1824 = vpop.f32.mrf.mxu0
        %v1825 = vadd.f32 %v1696, %v1824
        %1826 = vmatmul.f32.gmra.mxu0 %v1715
        %v1827 = vpop.f32.mrf.mxu0
        %v1828 = vadd.f32 %v1696, %v1827
        %1829 = vmatmul.f32.gmra.mxu0 %v1718
        %v1830 = vpop.f32.mrf.mxu0
        %v1831 = vadd.f32 %v1696, %v1830
        %1832 = vmatmul.f32.gmra.mxu0 %v1721
        %v1833 = vpop.f32.mrf.mxu0
        %v1834 = vadd.f32 %v1696, %v1833
        %1835 = vmatmul.f32.gmra.mxu0 %v1724
        %v1836 = vpop.f32.mrf.mxu0
        %v1837 = vadd.f32 %v1696, %v1836
        %1838 = vmatmul.f32.gmra.mxu0 %v1727
        %v1839 = vpop.f32.mrf.mxu0
        %v1840 = vadd.f32 %v1696, %v1839
        %1841 = vmatmul.f32.gmra.mxu0 %v1730
        %v1842 = vpop.f32.mrf.mxu0
        %v1843 = vadd.f32 %v1696, %v1842
        %1844 = vmatmul.f32.gmra.mxu0 %v1733
        %v1845 = vpop.f32.mrf.mxu0
        %v1846 = vadd.f32 %v1696, %v1845
        %1847 = vmatmul.f32.gmra.mxu0 %v1736
        %v1848 = vpop.f32.mrf.mxu0
        %v1849 = vadd.f32 %v1696, %v1848
        %1850 = vmatmul.f32.gmra.mxu0 %v1739
        %v1851 = vpop.f32.mrf.mxu0
        %v1852 = vadd.f32 %v1696, %v1851
        %1853 = vmatmul.f32.gmra.mxu0 %v1742
        %v1854 = vpop.f32.mrf.mxu0
        %v1855 = vadd.f32 %v1696, %v1854
        %1856 = vmatmul.f32.gmra.mxu0 %v1745
        %v1857 = vpop.f32.mrf.mxu0
        %v1858 = vadd.f32 %v1696, %v1857
        %1859 = vmatmul.f32.gmra.mxu0 %v1748
        %v1860 = vpop.f32.mrf.mxu0
        %v1861 = vadd.f32 %v1696, %v1860
        %1862 = vmatmul.f32.gmra.mxu0 %v1751
        %v1863 = vpop.f32.mrf.mxu0
        %v1864 = vadd.f32 %v1696, %v1863
        %1865 = vmatmul.f32.gmra.mxu0 %v1754
        %v1866 = vpop.f32.mrf.mxu0
        %v1867 = vadd.f32 %v1696, %v1866
        %1868 = vmatmul.f32.gmra.mxu0 %v1757
        %v1869 = vpop.f32.mrf.mxu0
        %v1870 = vadd.f32 %v1696, %v1869
        %1871 = vmatmul.f32.gmra.mxu0 %v1760
        %v1872 = vpop.f32.mrf.mxu0
        %v1873 = vadd.f32 %v1696, %v1872
        %1874 = vmatmul.f32.gmra.mxu0 %v1763
        %v1875 = vpop.f32.mrf.mxu0
        %v1876 = vadd.f32 %v1696, %v1875
        %1877 = vmatmul.f32.gmra.mxu0 %v1766
        %v1878 = vpop.f32.mrf.mxu0
        %v1879 = vadd.f32 %v1696, %v1878
        %1880 = vmatmul.f32.gmra.mxu0 %v1769
        %v1881 = vpop.f32.mrf.mxu0
        %v1882 = vadd.f32 %v1696, %v1881
        %1883 = vmatmul.f32.gmra.mxu0 %v1772
        %v1884 = vpop.f32.mrf.mxu0
        %v1885 = vadd.f32 %v1696, %v1884
        %1886 = vmatmul.f32.gmra.mxu0 %v1775
        %v1887 = vpop.f32.mrf.mxu0
        %v1888 = vadd.f32 %v1696, %v1887
        %1889 = vmatmul.f32.gmra.mxu0 %v1778
        %v1890 = vpop.f32.mrf.mxu0
        %v1891 = vadd.f32 %v1696, %v1890
        %1892 = vmatmul.f32.gmra.mxu0 %v1781
        %v1893 = vpop.f32.mrf.mxu0
        %v1894 = vadd.f32 %v1696, %v1893
        %1895 = vmatmul.f32.gmra.mxu0 %v1784
        %v1896 = vpop.f32.mrf.mxu0
        %v1897 = vadd.f32 %v1696, %v1896
        %1898 = vmatmul.f32.gmra.mxu0 %v1787
        %v1899 = vpop.f32.mrf.mxu0
        %v1900 = vadd.f32 %v1696, %v1899
        %1901 = vmatmul.f32.gmra.mxu0 %v1790
        %v1902 = vpop.f32.mrf.mxu0
        %v1903 = vadd.f32 %v1696, %v1902
        %1904 = vmatmul.f32.gmra.mxu0 %v1793
        %v1905 = vpop.f32.mrf.mxu0
        %v1906 = vadd.f32 %v1696, %v1905
        %1907 = vdwg.mxu0
        %1908 = vst [vmem:[%s271] sm:$0xff] %v1813
        %1909 = vst [vmem:[%s271 + $0x8] sm:$0xff] %v1816
        %1910 = vst [vmem:[%s271 + $0x10] sm:$0xff] %v1819
        %1911 = vst [vmem:[%s271 + $0x18] sm:$0xff] %v1822
        %1912 = vst [vmem:[%s271 + $0x20] sm:$0xff] %v1825
        %1913 = vst [vmem:[%s271 + $0x28] sm:$0xff] %v1828
        %1914 = vst [vmem:[%s271 + $0x30] sm:$0xff] %v1831
        %1915 = vst [vmem:[%s271 + $0x38] sm:$0xff] %v1834
        %1916 = vst [vmem:[%s271 + $0x40] sm:$0xff] %v1837
        %1917 = vst [vmem:[%s271 + $0x48] sm:$0xff] %v1840
        %1918 = vst [vmem:[%s271 + $0x50] sm:$0xff] %v1843
        %1919 = vst [vmem:[%s271 + $0x58] sm:$0xff] %v1846
        %1920 = vst [vmem:[%s271 + $0x60] sm:$0xff] %v1849
        %1921 = vst [vmem:[%s271 + $0x68] sm:$0xff] %v1852
        %1922 = vst [vmem:[%s271 + $0x70] sm:$0xff] %v1855
        %1923 = vst [vmem:[%s271 + $0x78] sm:$0xff] %v1858
        %1924 = vst [vmem:[%s271 + $0x80] sm:$0xff] %v1861
        %1925 = vst [vmem:[%s271 + $0x88] sm:$0xff] %v1864
        %1926 = vst [vmem:[%s271 + $0x90] sm:$0xff] %v1867
        %1927 = vst [vmem:[%s271 + $0x98] sm:$0xff] %v1870
        %1928 = vst [vmem:[%s271 + $0xa0] sm:$0xff] %v1873
        %1929 = vst [vmem:[%s271 + $0xa8] sm:$0xff] %v1876
        %1930 = vst [vmem:[%s271 + $0xb0] sm:$0xff] %v1879
        %1931 = vst [vmem:[%s271 + $0xb8] sm:$0xff] %v1882
        %1932 = vst [vmem:[%s271 + $0xc0] sm:$0xff] %v1885
        %1933 = vst [vmem:[%s271 + $0xc8] sm:$0xff] %v1888
        %1934 = vst [vmem:[%s271 + $0xd0] sm:$0xff] %v1891
        %1935 = vst [vmem:[%s271 + $0xd8] sm:$0xff] %v1894
        %1936 = vst [vmem:[%s271 + $0xe0] sm:$0xff] %v1897
        %1937 = vst [vmem:[%s271 + $0xe8] sm:$0xff] %v1900
        %1938 = vst [vmem:[%s271 + $0xf0] sm:$0xff] %v1903
        %1939 = vst [vmem:[%s271 + $0xf8] sm:$0xff] %v1906
        %s1940 = sand.u32 %s181, 1
        %s1941 = scalar_lea.sflag [#allocation4], %s1940
        %s1942 = sand.u32 %s181, 1
        %s1943 = smul.addr %s1942, 256
        %s1944 = scalar_lea.vmem [#allocation3], %s1943
        // Predicated region
        $region49: #{tpu_custom_call.1} parent=47 // pred_check
          %p1945 = pneg %p191
        $region50: #{tpu_custom_call.1} parent=47 // pred_check_branch
          %1947 = sbr.rel (%p1945) target = $region52
        $region51: #{tpu_custom_call.1} parent=47 // pred_region
          %1949 = vsyncadd %s1941, 0
          %s1950 = smul.addr %s21, 32
          %s1951 = smul.addr %s1950, 8
          %s1952 = scalar_lea.hbm %s7, %s1951
          %s1953 = sshll.u32 %s1944, 4
          %s1954 = int_to_ptr.vmem [resolvable:$true] %s1953
          %s1955 = sshll.u32 %s1952, 4
          %s1956 = int_to_ptr.hbm [resolvable:$true] %s1955
          %1961 = dma.vmem_to_hbm [thread:$0]  %s1954, 4096, %s1956, %s1941, 128, 128, 8
        $region52: #{tpu_custom_call.1} parent=47 // pred_fallthru
          _
      $region48: #{tpu_custom_call.1} parent=5 // pred_fallthru
        _
      %p1962 = scmp.le.s32.totalorder 2, %s16
      // Predicated region
      $region53: #{tpu_custom_call.1} parent=5 // pred_check
        %p1963 = pneg %p1962
      $region54: #{tpu_custom_call.1} parent=5 // pred_check_branch
        %1965 = sbr.rel (%p1963) target = $region56
      $region55: #{tpu_custom_call.1} parent=5 // pred_region
        %s1966 = ssub.s32 %s16, 2
        // Predicated region
        $region57: #{tpu_custom_call.1} parent=55 // pred_check
          %p1967 = pneg %p197
        $region58: #{tpu_custom_call.1} parent=55 // pred_check_branch
          %1969 = sbr.rel (%p1967) target = $region60
        $region59: #{tpu_custom_call.1} parent=55 // pred_region
          %s1970 = sand.u32 %s182, 1
          %s1971 = scalar_lea.sflag [#allocation4], %s1970
          %s1972 = sand.u32 %s182, 1
          %s1973 = smul.addr %s1972, 256
          %s1974 = scalar_lea.vmem [#allocation3], %s1973
          %1976 = dma.done %s1971, 4096
        $region60: #{tpu_custom_call.1} parent=55 // pred_fallthru
          _
      $region56: #{tpu_custom_call.1} parent=5 // pred_fallthru
        _
    $region6: #{tpu_custom_call.1} parent=1 // loop_footer
      %s20 = sadd.s32 1, %s16
    $region7: #{tpu_custom_call.1} parent=1 // loop_footer_branch
      %15 = sbr.rel target = $region3
    $region8: #{tpu_custom_call.1} parent=1 // loop_exit
      _
    %1977 = vsyncpa [#allocation4], 1
    %s1978 = scalar_lea.sflag [#allocation4], 1
    %1979 = vsyncpa %s1978, 1

</llo_original>
